<compile_context>
chip_gen: v7x
topology: tpu7x:2x2x1
jax: 0.10.0
libtpu: 0.0.40
codegen_flags: <defaults>
</compile_context>

<pallas_src>
import jax
import jax.numpy as jnp
import numpy as np
from jax.experimental import pallas as pl
from jax.experimental.pallas import tpu as pltpu


def _attention_kernel(q_ref, pk_ref, v_ref, m_ref, wq_ref, we_ref,
                      ctx_ref, alpha_ref):
    # Blocks (TB = batch rows handled per grid step):
    #   q_ref:   [TB, 1, Q]   pk_ref: [TB, M, H]   v_ref:  [TB, M, V]
    #   m_ref:   [TB, 1, M]   wq_ref: [Q, H]       we_ref: [1, H]
    #   ctx_ref: [TB, 1, V]   alpha_ref: [TB, 1, M]
    tb = q_ref.shape[0]

    q = q_ref[...].astype(jnp.float32)                       # [TB, 1, Q]
    pk = pk_ref[...].astype(jnp.float32)                     # [TB, M, H]
    v = v_ref[...]                                           # [TB, M, V]

    # Query projection on the MXU. Weights are broadcast across the (small)
    # batch block in-registers so we can use the well-supported batched-matmul
    # lowering path ('boq,bqh->boh').
    wq_b = jnp.broadcast_to(wq_ref[...], (tb,) + tuple(wq_ref.shape))   # [TB, Q, H]
    q_proj = jnp.einsum("boq,bqh->boh", q, wq_b,
                        preferred_element_type=jnp.float32)             # [TB, 1, H]

    # tanh(q + proj_key): VPU add + EUP tanh.
    t = jnp.tanh(q_proj + pk)                                           # [TB, M, H]

    # Energy projection on the MXU, producing a lane-dense [TB, 1, M] row
    # directly (no [M,1] column, no relayout).
    we_b = jnp.broadcast_to(we_ref[...], (tb,) + tuple(we_ref.shape))   # [TB, 1, H]
    scores = jnp.einsum("boh,bmh->bom", we_b, t,
                        preferred_element_type=jnp.float32)             # [TB, 1, M]

    # Masking (same -inf semantics as the PyTorch module; a fully-masked row
    # yields NaN alphas, identical to the reference behavior).
    scores = jnp.where(m_ref[...] == 0, -jnp.inf, scores)

    # Softmax over the lane axis M.
    mx = jnp.max(scores, axis=-1, keepdims=True)                        # [TB, 1, 1]
    e = jnp.exp(scores - mx)                                            # [TB, 1, M]
    denom = jnp.sum(e, axis=-1, keepdims=True)                          # [TB, 1, 1]
    alphas = e * pl.reciprocal(denom, approx=True)                      # [TB, 1, M]
    alpha_ref[...] = alphas.astype(alpha_ref.dtype)

    # context = alphas @ value on the MXU (batched matvec).
    ctx = jnp.einsum("bom,bmv->bov", alphas.astype(v.dtype), v,
                     preferred_element_type=jnp.float32)                # [TB, 1, V]
    ctx_ref[...] = ctx.astype(ctx_ref.dtype)


def _choose_batch_block(B, M, H, V, Q, itemsize=4, vmem_budget_bytes=24 << 20):
    """Largest batch block that keeps double-buffered tiles + f32 temporaries
    within a conservative VMEM budget (safe for v7x's 64 MiB), capped so that
    with B >= 2 the grid still has >= 2 steps for megacore sharding."""
    per_row = (M * H + M * V + 2 * M + Q + V) * itemsize   # pipelined I/O bytes / row
    per_row += (M * H + Q * H) * 4                         # in-kernel f32 temporaries
    tb = max(1, min(B, vmem_budget_bytes // (2 * per_row), 128))
    if B >= 2:
        tb = min(tb, pl.cdiv(B, 2))
    return int(tb)


def attention_forward(query, proj_key, value, mask, wq, we, *, block_b=None):
    """query: [B,1,Q], proj_key: [B,M,H], value: [B,M,V], mask: [B,M] (nonzero = keep),
    wq: [H,Q] (PyTorch Linear weight), we: [1,H] (PyTorch Linear weight)."""
    B, M, V = value.shape
    H = proj_key.shape[-1]
    Q = query.shape[-1]

    tb = _choose_batch_block(B, M, H, V, Q) if block_b is None else int(block_b)
    grid = (pl.cdiv(B, tb),)

    mask3 = mask.reshape(B, 1, M).astype(jnp.int32)   # lane-dense mask row per batch
    wq_t = wq.T                                       # [Q, H] so kernel does q @ Wq^T

    ctx, alphas = pl.pallas_call(
        _attention_kernel,
        out_shape=(
            jax.ShapeDtypeStruct((B, 1, V), query.dtype),
            jax.ShapeDtypeStruct((B, 1, M), query.dtype),
        ),
        grid_spec=pltpu.PrefetchScalarGridSpec(
            num_scalar_prefetch=0,
            grid=grid,
            in_specs=[
                pl.BlockSpec((tb, 1, Q), lambda b: (b, 0, 0)),
                pl.BlockSpec((tb, M, H), lambda b: (b, 0, 0)),
                pl.BlockSpec((tb, M, V), lambda b: (b, 0, 0)),
                pl.BlockSpec((tb, 1, M), lambda b: (b, 0, 0)),
                pl.BlockSpec((Q, H), lambda b: (0, 0)),
                pl.BlockSpec((1, H), lambda b: (0, 0)),
            ],
            out_specs=[
                pl.BlockSpec((tb, 1, V), lambda b: (b, 0, 0)),
                pl.BlockSpec((tb, 1, M), lambda b: (b, 0, 0)),
            ],
        ),
        compiler_params=pltpu.CompilerParams(
            dimension_semantics=("parallel",),
            vmem_limit_bytes=48 * 1024 * 1024,
        ),
    )(query, proj_key, value, mask3, wq_t, we)

    return ctx, alphas   # ctx: [B,1,V], alphas: [B,1,M] (already lane-dense, no transpose)


def _reference(query, proj_key, value, mask, wq, we):
    q = jnp.einsum("bld,hd->blh", query, wq)                             # [B,1,H]
    scores = jnp.einsum("bmh,oh->bmo", jnp.tanh(q + proj_key), we)       # [B,M,1]
    scores = jnp.transpose(scores, (0, 2, 1))                            # [B,1,M]
    scores = jnp.where(mask[:, None, :] == 0, -jnp.inf, scores)
    alphas = jax.nn.softmax(scores, axis=-1)                             # [B,1,M]
    context = jnp.einsum("bom,bmv->bov", alphas, value)                  # [B,1,V]
    return context, alphas


if __name__ == "__main__":
    hidden_size = 32
    key_size = 2 * hidden_size        # 64  (value feature size)
    query_size = hidden_size          # 32
    B, M = 8, 16

    key = jax.random.PRNGKey(0)
    k1, k2, k3, k4, k5 = jax.random.split(key, 5)

    # PyTorch Linear weight shapes: [out, in].
    wq = jax.random.normal(k1, (hidden_size, query_size), jnp.float32) * 0.1  # query_layer
    we = jax.random.normal(k2, (1, hidden_size), jnp.float32) * 0.1           # energy_layer
    # (key_layer / coverage_proj are not used in this forward path.)

    query = jax.random.normal(k3, (B, 1, query_size), jnp.float32)
    proj_key = jax.random.normal(k4, (B, M, hidden_size), jnp.float32)
    value = jax.random.normal(k5, (B, M, key_size), jnp.float32)

    # Length-based padding mask (arbitrary masks are also supported).
    lengths = jnp.array([16, 5, 16, 9, 1, 12, 16, 7])
    mask = (jnp.arange(M)[None, :] < lengths[:, None]).astype(jnp.int32)  # [B, M]

    ctx, alphas = attention_forward(query, proj_key, value, mask, wq, we)
    jax.block_until_ready((ctx, alphas))

    ctx_ref, alphas_ref = _reference(query, proj_key, value, mask, wq, we)
    # Tolerance accounts for the approx-reciprocal softmax normalization (EUP op).
    np.testing.assert_allclose(np.asarray(alphas), np.asarray(alphas_ref), rtol=5e-3, atol=5e-3)
    np.testing.assert_allclose(np.asarray(ctx), np.asarray(ctx_ref), rtol=5e-3, atol=5e-3)

    print("KERNEL_OK")
</pallas_src>

<mosaic_0001>
module attributes {stable_mosaic.version = 11 : i64} {
  func.func @_attention_kernel(%arg0: i32, %arg1: memref<4x1x32xf32, #tpu.memory_space<vmem>>, %arg2: memref<4x16x32xf32, #tpu.memory_space<vmem>>, %arg3: memref<4x16x64xf32, #tpu.memory_space<vmem>>, %arg4: memref<4x1x16xi32, #tpu.memory_space<vmem>>, %arg5: memref<32x32xf32, #tpu.memory_space<vmem>>, %arg6: memref<1x32xf32, #tpu.memory_space<vmem>>, %arg7: memref<4x1x64xf32, #tpu.memory_space<vmem>>, %arg8: memref<4x1x16xf32, #tpu.memory_space<vmem>>) attributes {dimension_semantics = [#tpu.dimension_semantics<parallel>], iteration_bounds = array<i64: 2>, scalar_prefetch = 0 : i64, scratch_operands = 0 : i64, tpu.core_type = #tpu.core_type<tc>, window_params = [{transform_indices = @transform_0, window_bounds = array<i64: 4, 1, 32>}, {transform_indices = @transform_1, window_bounds = array<i64: 4, 16, 32>}, {transform_indices = @transform_2, window_bounds = array<i64: 4, 16, 64>}, {transform_indices = @transform_3, window_bounds = array<i64: 4, 1, 16>}, {pipeline_mode = #tpu.pipeline_mode<synchronous>, transform_indices = @transform_4, window_bounds = array<i64: 32, 32>}, {pipeline_mode = #tpu.pipeline_mode<synchronous>, transform_indices = @transform_5, window_bounds = array<i64: 1, 32>}, {transform_indices = @transform_6, window_bounds = array<i64: 4, 1, 64>}, {transform_indices = @transform_7, window_bounds = array<i64: 4, 1, 16>}]} {
    %c0 = arith.constant 0 : index
    %c0_0 = arith.constant 0 : index
    %c0_1 = arith.constant 0 : index
    %0 = vector.load %arg1[%c0, %c0_0, %c0_1] : memref<4x1x32xf32, #tpu.memory_space<vmem>>, vector<4x1x32xf32>
    %c0_2 = arith.constant 0 : index
    %c0_3 = arith.constant 0 : index
    %c0_4 = arith.constant 0 : index
    %1 = vector.load %arg2[%c0_2, %c0_3, %c0_4] : memref<4x16x32xf32, #tpu.memory_space<vmem>>, vector<4x16x32xf32>
    %c0_5 = arith.constant 0 : index
    %c0_6 = arith.constant 0 : index
    %c0_7 = arith.constant 0 : index
    %2 = vector.load %arg3[%c0_5, %c0_6, %c0_7] : memref<4x16x64xf32, #tpu.memory_space<vmem>>, vector<4x16x64xf32>
    %c0_8 = arith.constant 0 : index
    %c0_9 = arith.constant 0 : index
    %3 = vector.load %arg5[%c0_8, %c0_9] : memref<32x32xf32, #tpu.memory_space<vmem>>, vector<32x32xf32>
    %4 = vector.shape_cast %3 : vector<32x32xf32> to vector<1x32x32xf32>
    %5 = vector.broadcast %4 : vector<1x32x32xf32> to vector<4x32x32xf32>
    "tpu.trace_start"() <{level = 10 : i32, message = "boq,bqh->boh"}> : () -> ()
    %cst = arith.constant dense<0.000000e+00> : vector<4x1x32xf32>
    %6 = tpu.matmul %0, %5, %cst {dimension_numbers = #tpu.dot_dimension_numbers<[2], [1], [1], [2], [0, 0, 0, 1, 1, 2], [0], [0]>} : vector<4x1x32xf32>, vector<4x32x32xf32>, vector<4x1x32xf32> -> vector<4x1x32xf32>
    "tpu.trace_stop"() : () -> ()
    %7 = vector.broadcast %6 : vector<4x1x32xf32> to vector<4x16x32xf32>
    %8 = arith.addf %7, %1 : vector<4x16x32xf32>
    %9 = math.tanh %8 : vector<4x16x32xf32>
    %c0_10 = arith.constant 0 : index
    %c0_11 = arith.constant 0 : index
    %10 = vector.load %arg6[%c0_10, %c0_11] : memref<1x32xf32, #tpu.memory_space<vmem>>, vector<1x32xf32>
    %11 = vector.shape_cast %10 : vector<1x32xf32> to vector<1x1x32xf32>
    %12 = vector.broadcast %11 : vector<1x1x32xf32> to vector<4x1x32xf32>
    "tpu.trace_start"() <{level = 10 : i32, message = "boh,bmh->bom"}> : () -> ()
    %cst_12 = arith.constant dense<0.000000e+00> : vector<4x1x16xf32>
    %13 = tpu.matmul %12, %9, %cst_12 {dimension_numbers = #tpu.dot_dimension_numbers<[2], [2], [1], [1], [0, 0, 0, 1, 1, 1], [0], [0]>} : vector<4x1x32xf32>, vector<4x16x32xf32>, vector<4x1x16xf32> -> vector<4x1x16xf32>
    "tpu.trace_stop"() : () -> ()
    %c0_13 = arith.constant 0 : index
    %c0_14 = arith.constant 0 : index
    %c0_15 = arith.constant 0 : index
    %14 = vector.load %arg4[%c0_13, %c0_14, %c0_15] : memref<4x1x16xi32, #tpu.memory_space<vmem>>, vector<4x1x16xi32>
    %c0_i32 = arith.constant 0 : i32
    %15 = vector.broadcast %c0_i32 : i32 to vector<4x1x16xi32>
    %16 = arith.cmpi eq, %14, %15 : vector<4x1x16xi32>
    %cst_16 = arith.constant 0xFF800000 : f32
    %17 = vector.broadcast %cst_16 : f32 to vector<4x1x16xf32>
    %18 = arith.select %16, %17, %13 : vector<4x1x16xi1>, vector<4x1x16xf32>
    %cst_17 = arith.constant dense<0xFF800000> : vector<4x1xf32>
    %19 = vector.multi_reduction <maximumf>, %18, %cst_17 [2] : vector<4x1x16xf32> to vector<4x1xf32>
    %20 = vector.shape_cast %19 : vector<4x1xf32> to vector<4x1x1xf32>
    %21 = vector.broadcast %20 : vector<4x1x1xf32> to vector<4x1x16xf32>
    %22 = arith.subf %18, %21 : vector<4x1x16xf32>
    %23 = math.exp %22 : vector<4x1x16xf32>
    %cst_18 = arith.constant dense<0.000000e+00> : vector<4x1xf32>
    %24 = vector.multi_reduction <add>, %23, %cst_18 [2] : vector<4x1x16xf32> to vector<4x1xf32>
    %25 = vector.shape_cast %24 : vector<4x1xf32> to vector<4x1x1xf32>
    %26 = tpu.reciprocal %25 {approx = true} : vector<4x1x1xf32> -> vector<4x1x1xf32>
    %27 = vector.broadcast %26 : vector<4x1x1xf32> to vector<4x1x16xf32>
    %28 = arith.mulf %23, %27 : vector<4x1x16xf32>
    %c0_19 = arith.constant 0 : index
    %c0_20 = arith.constant 0 : index
    %c0_21 = arith.constant 0 : index
    %29 = vector.load %arg8[%c0_19, %c0_20, %c0_21] : memref<4x1x16xf32, #tpu.memory_space<vmem>>, vector<4x1x16xf32>
    tpu.vector_store %arg8[%c0_19, %c0_20, %c0_21], %28 {strides = array<i32>} : memref<4x1x16xf32, #tpu.memory_space<vmem>>, vector<4x1x16xf32>,
    "tpu.trace_start"() <{level = 10 : i32, message = "bom,bmv->bov"}> : () -> ()
    %cst_22 = arith.constant dense<0.000000e+00> : vector<4x1x64xf32>
    %30 = tpu.matmul %28, %2, %cst_22 {dimension_numbers = #tpu.dot_dimension_numbers<[2], [1], [1], [2], [0, 0, 0, 1, 1, 2], [0], [0]>} : vector<4x1x16xf32>, vector<4x16x64xf32>, vector<4x1x64xf32> -> vector<4x1x64xf32>
    "tpu.trace_stop"() : () -> ()
    %c0_23 = arith.constant 0 : index
    %c0_24 = arith.constant 0 : index
    %c0_25 = arith.constant 0 : index
    %31 = vector.load %arg7[%c0_23, %c0_24, %c0_25] : memref<4x1x64xf32, #tpu.memory_space<vmem>>, vector<4x1x64xf32>
    tpu.vector_store %arg7[%c0_23, %c0_24, %c0_25], %30 {strides = array<i32>} : memref<4x1x64xf32, #tpu.memory_space<vmem>>, vector<4x1x64xf32>,
    return
  }
  func.func @transform_0(%arg0: i32) -> (i32, i32, i32) {
    %c0_i32 = arith.constant 0 : i32
    %c0_i32_0 = arith.constant 0 : i32
    %c0_i32_1 = arith.constant 0 : i32
    return %arg0, %c0_i32, %c0_i32_0 : i32, i32, i32
  }
  func.func @transform_1(%arg0: i32) -> (i32, i32, i32) {
    %c0_i32 = arith.constant 0 : i32
    %c0_i32_0 = arith.constant 0 : i32
    %c0_i32_1 = arith.constant 0 : i32
    return %arg0, %c0_i32, %c0_i32_0 : i32, i32, i32
  }
  func.func @transform_2(%arg0: i32) -> (i32, i32, i32) {
    %c0_i32 = arith.constant 0 : i32
    %c0_i32_0 = arith.constant 0 : i32
    %c0_i32_1 = arith.constant 0 : i32
    return %arg0, %c0_i32, %c0_i32_0 : i32, i32, i32
  }
  func.func @transform_3(%arg0: i32) -> (i32, i32, i32) {
    %c0_i32 = arith.constant 0 : i32
    %c0_i32_0 = arith.constant 0 : i32
    %c0_i32_1 = arith.constant 0 : i32
    return %arg0, %c0_i32, %c0_i32_0 : i32, i32, i32
  }
  func.func @transform_4(%arg0: i32) -> (i32, i32) {
    %c0_i32 = arith.constant 0 : i32
    %c0_i32_0 = arith.constant 0 : i32
    %c0_i32_1 = arith.constant 0 : i32
    return %c0_i32, %c0_i32_0 : i32, i32
  }
  func.func @transform_5(%arg0: i32) -> (i32, i32) {
    %c0_i32 = arith.constant 0 : i32
    %c0_i32_0 = arith.constant 0 : i32
    %c0_i32_1 = arith.constant 0 : i32
    return %c0_i32, %c0_i32_0 : i32, i32
  }
  func.func @transform_6(%arg0: i32) -> (i32, i32, i32) {
    %c0_i32 = arith.constant 0 : i32
    %c0_i32_0 = arith.constant 0 : i32
    %c0_i32_1 = arith.constant 0 : i32
    return %arg0, %c0_i32, %c0_i32_0 : i32, i32, i32
  }
  func.func @transform_7(%arg0: i32) -> (i32, i32, i32) {
    %c0_i32 = arith.constant 0 : i32
    %c0_i32_0 = arith.constant 0 : i32
    %c0_i32_1 = arith.constant 0 : i32
    return %arg0, %c0_i32, %c0_i32_0 : i32, i32, i32
  }
}

</mosaic_0001>

<llo_original>
// kernel: tpu_custom_call.1
$region0: #{tpu_custom_call.1}
  #allocation0 [shape = 'u32[]', space=smem, size = 0x4, offset = 0x4, fixed_abs, tag = 'smem constant byte address 0x4 - core index']
  #allocation1 [shape = 'u32[144,128]{1,0:T(1,128)}', space=vmem, size = 0x12000, scoped, tag = 'internal scratch']
  %s0 = inlined_call_operand.hbm [shape: f32[8,1,32], index: 0, kind: input, shape index: {}]
  %s1 = inlined_call_operand.hbm [shape: f32[8,16,32], index: 1, kind: input, shape index: {}]
  %s2 = inlined_call_operand.hbm [shape: f32[8,16,64], index: 2, kind: input, shape index: {}]
  %s3 = inlined_call_operand.vmem [shape: s32[8,1,16], index: 3, kind: input, shape index: {}]
  %s4 = inlined_call_operand.hbm [shape: f32[32,32], index: 4, kind: input, shape index: {}]
  %s5 = inlined_call_operand.vmem [shape: f32[1,32], index: 5, kind: input, shape index: {}]
  %s6 = inlined_call_operand.hbm [shape: f32[8,1,64], index: 6, kind: output, shape index: {0}]
  %s7 = inlined_call_operand.hbm [shape: f32[8,1,16], index: 7, kind: output, shape index: {1}]
  %8 = xla_tuple %s6, %s7
  %s9 = sld [smem:[#allocation0]]
  $region81: #{tpu_custom_call.1} parent=0
    _
  %s11 = ssub.s32 1, %s9
  %s12 = scalar_select 0, %s11, %s9
  $region1: #{tpu_custom_call.1} parent=0
    #allocation2 [shape = 'u8[4096]{0}', space=vmem, size = 0x1000, scoped, tag = 'input window, operand 0']
    #allocation3 [shape = 's32[2]{0}', space=sflag, size = 0x8, scoped, tag = 'scoped memory for tpu_custom_call.1']
    #allocation4 [shape = 's32[2]{0}', space=sflag, size = 0x8, scoped, tag = 'scoped memory for tpu_custom_call.1']
    #allocation5 [shape = 'u8[65536]{0}', space=vmem, size = 0x10000, scoped, tag = 'input window, operand 1']
    #allocation6 [shape = 's32[2]{0}', space=sflag, size = 0x8, scoped, tag = 'scoped memory for tpu_custom_call.1']
    #allocation7 [shape = 'u8[65536]{0}', space=vmem, size = 0x10000, scoped, tag = 'input window, operand 2']
    #allocation8 [shape = 'u8[16384]{0}', space=vmem, size = 0x4000, scoped, tag = 'input window, operand 4, single buffered']
    #allocation9 [shape = 's32[1]{0}', space=sflag, size = 0x4, scoped, tag = 'scoped memory for tpu_custom_call.1']
    #allocation10 [shape = 'u8[4096]{0}', space=vmem, size = 0x1000, scoped, tag = 'output window, operand 0']
    #allocation11 [shape = 'u8[4096]{0}', space=vmem, size = 0x1000, scoped, tag = 'output window, operand 1']
    #allocation12 [shape = 's32[2]{0}', space=sflag, size = 0x8, scoped, tag = 'scoped memory for tpu_custom_call.1']
    %13 = vsyncpa [#allocation3], 0
    %s14 = scalar_lea.sflag [#allocation3], 1
    %15 = vsyncpa %s14, 0
    %16 = vsyncpa [#allocation6], 0
    %s17 = scalar_lea.sflag [#allocation6], 1
    %18 = vsyncpa %s17, 0
    %19 = vsyncpa [#allocation9], 0
    %20 = vsyncpa [#allocation4], 0
    %s21 = scalar_lea.sflag [#allocation4], 1
    %22 = vsyncpa %s21, 0
    %23 = vsyncpa [#allocation12], 0
    %s24 = scalar_lea.sflag [#allocation12], 1
    %25 = vsyncpa %s24, 0
    loop: start=0, step=1, limit=4
    $region2: #{tpu_custom_call.1} parent=1 // loop_pre_header
      _
    $region3: #{tpu_custom_call.1} parent=1 // loop_header
      %s27 = sphi 0, %s31
      %p28 = scmp.ge.s32.totalorder %s27, 4
      %s37 = sphi 0, %s39
      %s40 = sphi 0, %s37
      %s41 = sphi 0, %s40
      %s57 = sphi 0, %s41
      %s63 = sphi 0, %s65
      %s66 = sphi 0, %s63
      %s67 = sphi 0, %s66
      %s83 = sphi 0, %s67
      %s89 = sphi 0, %s91
      %s92 = sphi 0, %s89
      %s93 = sphi 0, %s92
      %s109 = sphi 0, %s93
      %s115 = sphi 0, %s117
      %s118 = sphi 0, %s115
      %s119 = sphi 0, %s118
      %s135 = sphi 0, %s119
      %s139 = sphi 0, %s139
      %s141 = sphi 0, %s139
      %s142 = sphi 0, %s141
      %s156 = sphi 0, %s142
      %s160 = sphi 0, %s160
      %s162 = sphi 0, %s160
      %s163 = sphi 0, %s162
      %s177 = sphi 0, %s163
      %s183 = sphi 0, %s185
      %s186 = sphi 0, %s183
      %s187 = sphi 0, %s186
      %s203 = sphi 0, %s187
      %s209 = sphi 0, %s211
      %s212 = sphi 0, %s209
      %s213 = sphi 0, %s212
      %s229 = sphi 0, %s213
    $region4: #{tpu_custom_call.1} parent=1 // loop_header_branch
      %30 = sbr.rel (%p28) target = $region8
    $region5: #{tpu_custom_call.1} parent=1 // loop_body
      %s32 = ssub.s32 %s27, 1
      %s33 = ssub.s32 %s27, 2
      %s34 = sadd.s32 %s27, 1
      %s35 = ssub.s32 %s27, %s34
      %p36 = scmp.eq.s32.totalorder %s35, 0
      %s38 = sadd.s32 %s37, 1
      %s39 = scalar_select %p36, %s37, %s38
      %p42 = pneg %p36
      %p43 = scmp.eq.s32.totalorder %s27, 1
      %p44 = por %p42, %p43
      %p45 = scmp.ne.s32.totalorder %s37, %s40
      %p46 = scmp.eq.s32.totalorder %s27, 0
      %p47 = por %p45, %p46
      %p48 = scmp.ne.s32.totalorder %s37, %s40
      %p49 = scmp.eq.s32.totalorder %s32, 1
      %p50 = por %p48, %p49
      %p51 = scmp.ne.s32.totalorder %s40, %s41
      %p52 = scmp.eq.s32.totalorder %s32, 0
      %p53 = por %p51, %p52
      %p54 = scmp.ne.s32.totalorder %s40, %s41
      %p55 = scmp.eq.s32.totalorder %s33, 1
      %p56 = por %p54, %p55
      %p58 = scmp.ne.s32.totalorder %s41, %s57
      %p59 = scmp.eq.s32.totalorder %s33, 0
      %p60 = por %p58, %p59
      %s61 = ssub.s32 %s27, %s34
      %p62 = scmp.eq.s32.totalorder %s61, 0
      %s64 = sadd.s32 %s63, 1
      %s65 = scalar_select %p62, %s63, %s64
      %p68 = pneg %p62
      %p69 = scmp.eq.s32.totalorder %s27, 1
      %p70 = por %p68, %p69
      %p71 = scmp.ne.s32.totalorder %s63, %s66
      %p72 = scmp.eq.s32.totalorder %s27, 0
      %p73 = por %p71, %p72
      %p74 = scmp.ne.s32.totalorder %s63, %s66
      %p75 = scmp.eq.s32.totalorder %s32, 1
      %p76 = por %p74, %p75
      %p77 = scmp.ne.s32.totalorder %s66, %s67
      %p78 = scmp.eq.s32.totalorder %s32, 0
      %p79 = por %p77, %p78
      %p80 = scmp.ne.s32.totalorder %s66, %s67
      %p81 = scmp.eq.s32.totalorder %s33, 1
      %p82 = por %p80, %p81
      %p84 = scmp.ne.s32.totalorder %s67, %s83
      %p85 = scmp.eq.s32.totalorder %s33, 0
      %p86 = por %p84, %p85
      %s87 = ssub.s32 %s27, %s34
      %p88 = scmp.eq.s32.totalorder %s87, 0
      %s90 = sadd.s32 %s89, 1
      %s91 = scalar_select %p88, %s89, %s90
      %p94 = pneg %p88
      %p95 = scmp.eq.s32.totalorder %s27, 1
      %p96 = por %p94, %p95
      %p97 = scmp.ne.s32.totalorder %s89, %s92
      %p98 = scmp.eq.s32.totalorder %s27, 0
      %p99 = por %p97, %p98
      %p100 = scmp.ne.s32.totalorder %s89, %s92
      %p101 = scmp.eq.s32.totalorder %s32, 1
      %p102 = por %p100, %p101
      %p103 = scmp.ne.s32.totalorder %s92, %s93
      %p104 = scmp.eq.s32.totalorder %s32, 0
      %p105 = por %p103, %p104
      %p106 = scmp.ne.s32.totalorder %s92, %s93
      %p107 = scmp.eq.s32.totalorder %s33, 1
      %p108 = por %p106, %p107
      %p110 = scmp.ne.s32.totalorder %s93, %s109
      %p111 = scmp.eq.s32.totalorder %s33, 0
      %p112 = por %p110, %p111
      %s113 = ssub.s32 %s27, %s34
      %p114 = scmp.eq.s32.totalorder %s113, 0
      %s116 = sadd.s32 %s115, 1
      %s117 = scalar_select %p114, %s115, %s116
      %p120 = pneg %p114
      %p121 = scmp.eq.s32.totalorder %s27, 1
      %p122 = por %p120, %p121
      %p123 = scmp.ne.s32.totalorder %s115, %s118
      %p124 = scmp.eq.s32.totalorder %s27, 0
      %p125 = por %p123, %p124
      %p126 = scmp.ne.s32.totalorder %s115, %s118
      %p127 = scmp.eq.s32.totalorder %s32, 1
      %p128 = por %p126, %p127
      %p129 = scmp.ne.s32.totalorder %s118, %s119
      %p130 = scmp.eq.s32.totalorder %s32, 0
      %p131 = por %p129, %p130
      %p132 = scmp.ne.s32.totalorder %s118, %s119
      %p133 = scmp.eq.s32.totalorder %s33, 1
      %p134 = por %p132, %p133
      %p136 = scmp.ne.s32.totalorder %s119, %s135
      %p137 = scmp.eq.s32.totalorder %s33, 0
      %p138 = por %p136, %p137
      %s140 = sadd.s32 %s139, 1
      %p143 = scmp.eq.s32.totalorder %s27, 1
      %p144 = scmp.ne.s32.totalorder %s139, %s141
      %p145 = scmp.eq.s32.totalorder %s27, 0
      %p146 = por %p144, %p145
      %p147 = scmp.ne.s32.totalorder %s139, %s141
      %p148 = scmp.eq.s32.totalorder %s32, 1
      %p149 = por %p147, %p148
      %p150 = scmp.ne.s32.totalorder %s141, %s142
      %p151 = scmp.eq.s32.totalorder %s32, 0
      %p152 = por %p150, %p151
      %p153 = scmp.ne.s32.totalorder %s141, %s142
      %p154 = scmp.eq.s32.totalorder %s33, 1
      %p155 = por %p153, %p154
      %p157 = scmp.ne.s32.totalorder %s142, %s156
      %p158 = scmp.eq.s32.totalorder %s33, 0
      %p159 = por %p157, %p158
      %s161 = sadd.s32 %s160, 1
      %p164 = scmp.eq.s32.totalorder %s27, 1
      %p165 = scmp.ne.s32.totalorder %s160, %s162
      %p166 = scmp.eq.s32.totalorder %s27, 0
      %p167 = por %p165, %p166
      %p168 = scmp.ne.s32.totalorder %s160, %s162
      %p169 = scmp.eq.s32.totalorder %s32, 1
      %p170 = por %p168, %p169
      %p171 = scmp.ne.s32.totalorder %s162, %s163
      %p172 = scmp.eq.s32.totalorder %s32, 0
      %p173 = por %p171, %p172
      %p174 = scmp.ne.s32.totalorder %s162, %s163
      %p175 = scmp.eq.s32.totalorder %s33, 1
      %p176 = por %p174, %p175
      %p178 = scmp.ne.s32.totalorder %s163, %s177
      %p179 = scmp.eq.s32.totalorder %s33, 0
      %p180 = por %p178, %p179
      %s181 = ssub.s32 %s27, %s34
      %p182 = scmp.eq.s32.totalorder %s181, 0
      %s184 = sadd.s32 %s183, 1
      %s185 = scalar_select %p182, %s183, %s184
      %p188 = pneg %p182
      %p189 = scmp.eq.s32.totalorder %s27, 1
      %p190 = por %p188, %p189
      %p191 = scmp.ne.s32.totalorder %s183, %s186
      %p192 = scmp.eq.s32.totalorder %s27, 0
      %p193 = por %p191, %p192
      %p194 = scmp.ne.s32.totalorder %s183, %s186
      %p195 = scmp.eq.s32.totalorder %s32, 1
      %p196 = por %p194, %p195
      %p197 = scmp.ne.s32.totalorder %s186, %s187
      %p198 = scmp.eq.s32.totalorder %s32, 0
      %p199 = por %p197, %p198
      %p200 = scmp.ne.s32.totalorder %s186, %s187
      %p201 = scmp.eq.s32.totalorder %s33, 1
      %p202 = por %p200, %p201
      %p204 = scmp.ne.s32.totalorder %s187, %s203
      %p205 = scmp.eq.s32.totalorder %s33, 0
      %p206 = por %p204, %p205
      %s207 = ssub.s32 %s27, %s34
      %p208 = scmp.eq.s32.totalorder %s207, 0
      %s210 = sadd.s32 %s209, 1
      %s211 = scalar_select %p208, %s209, %s210
      %p214 = pneg %p208
      %p215 = scmp.eq.s32.totalorder %s27, 1
      %p216 = por %p214, %p215
      %p217 = scmp.ne.s32.totalorder %s209, %s212
      %p218 = scmp.eq.s32.totalorder %s27, 0
      %p219 = por %p217, %p218
      %p220 = scmp.ne.s32.totalorder %s209, %s212
      %p221 = scmp.eq.s32.totalorder %s32, 1
      %p222 = por %p220, %p221
      %p223 = scmp.ne.s32.totalorder %s212, %s213
      %p224 = scmp.eq.s32.totalorder %s32, 0
      %p225 = por %p223, %p224
      %p226 = scmp.ne.s32.totalorder %s212, %s213
      %p227 = scmp.eq.s32.totalorder %s33, 1
      %p228 = por %p226, %p227
      %p230 = scmp.ne.s32.totalorder %s213, %s229
      %p231 = scmp.eq.s32.totalorder %s33, 0
      %p232 = por %p230, %p231
      %p233 = scmp.le.s32.totalorder 1, %s27
      %p234 = scmp.lt.s32.totalorder %s27, 3
      %p235 = pnand %p233, %p234
      %p236 = pneg %p235
      // Predicated region
      $region9: #{tpu_custom_call.1} parent=5 // pred_check
        _
      $region10: #{tpu_custom_call.1} parent=5 // pred_check_branch
        %238 = sbr.rel (%p235) target = $region12
      $region11: #{tpu_custom_call.1} parent=5 // pred_region
        %s239 = ssub.s32 %s27, 1
        // Predicated region
        $region13: #{tpu_custom_call.1} parent=11 // pred_check
          %p240 = pneg %p152
        $region14: #{tpu_custom_call.1} parent=11 // pred_check_branch
          %242 = sbr.rel (%p240) target = $region16
        $region15: #{tpu_custom_call.1} parent=11 // pred_region
          %s244 = ssub.s32 512, 512
          %245 = vsyncadd [#allocation9], %s244
          %s246 = sshll.u32 [#allocation8], 4
          %s247 = int_to_ptr.vmem [resolvable:$true] %s246
          %252 = dma.hbm_to_vmem [thread:$0]  %s4, 512, %s247, [#allocation9], 128, 128, 8
        $region16: #{tpu_custom_call.1} parent=11 // pred_fallthru
          _
        // Predicated region
        $region17: #{tpu_custom_call.1} parent=11 // pred_check
          %p253 = pneg %p173
        $region18: #{tpu_custom_call.1} parent=11 // pred_check_branch
          %255 = sbr.rel (%p253) target = $region20
        $region19: #{tpu_custom_call.1} parent=11 // pred_region
          _
        $region20: #{tpu_custom_call.1} parent=11 // pred_fallthru
          _
      $region12: #{tpu_custom_call.1} parent=5 // pred_fallthru
        _
      %p256 = scmp.lt.s32.totalorder %s27, 2
      // Predicated region
      $region21: #{tpu_custom_call.1} parent=5 // pred_check
        %p257 = pneg %p256
      $region22: #{tpu_custom_call.1} parent=5 // pred_check_branch
        %259 = sbr.rel (%p257) target = $region24
      $region23: #{tpu_custom_call.1} parent=5 // pred_region
        // Predicated region
        $region25: #{tpu_custom_call.1} parent=23 // pred_check
          %p260 = pneg %p47
        $region26: #{tpu_custom_call.1} parent=23 // pred_check_branch
          %262 = sbr.rel (%p260) target = $region28
        $region27: #{tpu_custom_call.1} parent=23 // pred_region
          %s263 = sand.u32 %s37, 1
          %s264 = scalar_lea.sflag [#allocation3], %s263
          %s265 = sand.u32 %s37, 1
          %s266 = smul.addr %s265, 4
          %s267 = scalar_lea.vmem [#allocation2], %s266
          %s268 = smul.u32 4, %s27
          %s270 = ssub.s32 64, 64
          %271 = vsyncadd %s264, %s270
          %s272 = smul.addr %s268, 16
          %s273 = scalar_lea.hbm %s0, %s272
          %s274 = sshll.u32 %s267, 4
          %s275 = int_to_ptr.vmem [resolvable:$true] %s274
          %280 = dma.hbm_to_vmem [thread:$0]  %s273, 64, %s275, %s264, 16, 16, 1
        $region28: #{tpu_custom_call.1} parent=23 // pred_fallthru
          _
        // Predicated region
        $region29: #{tpu_custom_call.1} parent=23 // pred_check
          %p281 = pneg %p73
        $region30: #{tpu_custom_call.1} parent=23 // pred_check_branch
          %283 = sbr.rel (%p281) target = $region32
        $region31: #{tpu_custom_call.1} parent=23 // pred_region
          %s284 = sand.u32 %s27, 1
          %s285 = scalar_lea.sflag [#allocation6], %s284
          %s286 = sand.u32 %s63, 1
          %s287 = smul.addr %s286, 64
          %s288 = scalar_lea.vmem [#allocation5], %s287
          %s289 = smul.u32 4, %s27
          %s291 = ssub.s32 1024, 1024
          %292 = vsyncadd %s285, %s291
          %s293 = smul.addr %s289, 2
          %s294 = smul.addr %s293, 128
          %s295 = scalar_lea.hbm %s1, %s294
          %s296 = sshll.u32 %s288, 4
          %s297 = int_to_ptr.vmem [resolvable:$true] %s296
          %302 = dma.hbm_to_vmem [thread:$0]  %s295, 1024, %s297, %s285, 128, 128, 8
        $region32: #{tpu_custom_call.1} parent=23 // pred_fallthru
          _
        // Predicated region
        $region33: #{tpu_custom_call.1} parent=23 // pred_check
          %p303 = pneg %p99
        $region34: #{tpu_custom_call.1} parent=23 // pred_check_branch
          %305 = sbr.rel (%p303) target = $region36
        $region35: #{tpu_custom_call.1} parent=23 // pred_region
          %s306 = sand.u32 %s27, 1
          %s307 = scalar_lea.sflag [#allocation6], %s306
          %s308 = sand.u32 %s89, 1
          %s309 = smul.addr %s308, 64
          %s310 = scalar_lea.vmem [#allocation7], %s309
          %s311 = smul.u32 4, %s27
          %s313 = ssub.s32 1024, 1024
          %314 = vsyncadd %s307, %s313
          %s315 = smul.addr %s311, 2
          %s316 = smul.addr %s315, 128
          %s317 = scalar_lea.hbm %s2, %s316
          %s318 = sshll.u32 %s310, 4
          %s319 = int_to_ptr.vmem [resolvable:$true] %s318
          %324 = dma.hbm_to_vmem [thread:$0]  %s317, 1024, %s319, %s307, 128, 128, 8
        $region36: #{tpu_custom_call.1} parent=23 // pred_fallthru
          _
        // Predicated region
        $region37: #{tpu_custom_call.1} parent=23 // pred_check
          %p325 = pneg %p125
        $region38: #{tpu_custom_call.1} parent=23 // pred_check_branch
          %327 = sbr.rel (%p325) target = $region40
        $region39: #{tpu_custom_call.1} parent=23 // pred_region
          %s328 = smul.u32 4, %s27
          %p329 = scmp.lt.s32.totalorder %s328, 7
          %s330 = scalar_select %p329, %s328, 7
          %s331 = scalar_lea.vmem %s3, %s330
          %s332 = smul.u32 4, %s27
        $region40: #{tpu_custom_call.1} parent=23 // pred_fallthru
          _
      $region24: #{tpu_custom_call.1} parent=5 // pred_fallthru
        _
      %p333 = scmp.le.s32.totalorder 1, %s27
      %p334 = scmp.lt.s32.totalorder %s27, 3
      %p335 = pnand %p333, %p334
      %p336 = pneg %p335
      // Predicated region
      $region41: #{tpu_custom_call.1} parent=5 // pred_check
        _
      $region42: #{tpu_custom_call.1} parent=5 // pred_check_branch
        %338 = sbr.rel (%p335) target = $region44
      $region43: #{tpu_custom_call.1} parent=5 // pred_region
        %s339 = ssub.s32 %s27, 1
        %s340 = sand.u32 %s40, 1
        %s341 = scalar_lea.sflag [#allocation3], %s340
        %s342 = sand.u32 %s40, 1
        %s343 = smul.addr %s342, 4
        %s344 = scalar_lea.vmem [#allocation2], %s343
        // Predicated region
        $region45: #{tpu_custom_call.1} parent=43 // pred_check
          %p345 = pneg %p53
        $region46: #{tpu_custom_call.1} parent=43 // pred_check_branch
          %347 = sbr.rel (%p345) target = $region48
        $region47: #{tpu_custom_call.1} parent=43 // pred_region
          %348 = dma.done %s341, 64
        $region48: #{tpu_custom_call.1} parent=43 // pred_fallthru
          _
        %s349 = sand.u32 %s32, 1
        %s350 = scalar_lea.sflag [#allocation6], %s349
        %s351 = sand.u32 %s66, 1
        %s352 = smul.addr %s351, 64
        %s353 = scalar_lea.vmem [#allocation5], %s352
        // Predicated region
        $region49: #{tpu_custom_call.1} parent=43 // pred_check
          %p354 = pneg %p79
        $region50: #{tpu_custom_call.1} parent=43 // pred_check_branch
          %356 = sbr.rel (%p354) target = $region52
        $region51: #{tpu_custom_call.1} parent=43 // pred_region
          %357 = dma.done %s350, 1024
        $region52: #{tpu_custom_call.1} parent=43 // pred_fallthru
          _
        %s358 = sand.u32 %s32, 1
        %s359 = scalar_lea.sflag [#allocation6], %s358
        %s360 = sand.u32 %s92, 1
        %s361 = smul.addr %s360, 64
        %s362 = scalar_lea.vmem [#allocation7], %s361
        // Predicated region
        $region53: #{tpu_custom_call.1} parent=43 // pred_check
          %p363 = pneg %p105
        $region54: #{tpu_custom_call.1} parent=43 // pred_check_branch
          %365 = sbr.rel (%p363) target = $region56
        $region55: #{tpu_custom_call.1} parent=43 // pred_region
          %366 = dma.done %s359, 1024
        $region56: #{tpu_custom_call.1} parent=43 // pred_fallthru
          _
        // Predicated region
        $region57: #{tpu_custom_call.1} parent=43 // pred_check
          %p367 = pneg %p152
        $region58: #{tpu_custom_call.1} parent=43 // pred_check_branch
          %369 = sbr.rel (%p367) target = $region60
        $region59: #{tpu_custom_call.1} parent=43 // pred_region
          %370 = dma.done [#allocation9], 512
        $region60: #{tpu_custom_call.1} parent=43 // pred_fallthru
          _
        %s371 = sand.u32 %s40, 1
        %s372 = scalar_lea.sflag [#allocation3], %s371
        %s373 = sand.u32 %s40, 1
        %s374 = smul.addr %s373, 4
        %s375 = scalar_lea.vmem [#allocation2], %s374
        %p376 = pneg %p53
        %p377 = pneg %p50
        %s378 = sand.u32 %s32, 1
        %s379 = scalar_lea.sflag [#allocation6], %s378
        %s380 = sand.u32 %s66, 1
        %s381 = smul.addr %s380, 64
        %s382 = scalar_lea.vmem [#allocation5], %s381
        %p383 = pneg %p79
        %p384 = pneg %p76
        %s385 = sand.u32 %s32, 1
        %s386 = scalar_lea.sflag [#allocation6], %s385
        %s387 = sand.u32 %s92, 1
        %s388 = smul.addr %s387, 64
        %s389 = scalar_lea.vmem [#allocation7], %s388
        %p390 = pneg %p105
        %p391 = pneg %p102
        %s392 = smul.u32 4, %s32
        %p393 = scmp.lt.s32.totalorder %s392, 7
        %s394 = scalar_select %p393, %s392, 7
        %s395 = scalar_lea.vmem %s3, %s394
        %p396 = pneg %p131
        %p397 = pneg %p128
        %p398 = pneg %p152
        %p399 = pneg %p149
        %p400 = pneg %p173
        %p401 = pneg %p170
        %p402 = pneg %p199
        %p403 = pneg %p196
        %s404 = sand.u32 %s186, 1
        %s405 = scalar_lea.sflag [#allocation4], %s404
        %s406 = sand.u32 %s186, 1
        %s407 = smul.addr %s406, 4
        %s408 = scalar_lea.vmem [#allocation10], %s407
        %p409 = pneg %p225
        %p410 = pneg %p222
        %s411 = sand.u32 %s212, 1
        %s412 = scalar_lea.sflag [#allocation12], %s411
        %s413 = sand.u32 %s212, 1
        %s414 = smul.addr %s413, 4
        %s415 = scalar_lea.vmem [#allocation11], %s414
        %s416 = smul.u32 4, %s32
        %s417 = smul.u32 4, %s32
        %s418 = smul.u32 4, %s32
        %s419 = smul.u32 4, %s32
        %p420 = scmp.lt.s32.totalorder %s419, 7
        %s421 = scalar_select %p420, %s419, 7
        %s422 = scalar_lea.vmem %s3, %s421
        %s423 = smul.u32 4, %s32
        %s424 = smul.u32 4, %s32
        %s425 = smul.u32 4, %s32
        %v426 = vld [vmem:[%s344] sm:$0x1]
        %v427 = vld [vmem:[%s344 + $0x1] sm:$0x1]
        %v428 = vld [vmem:[%s344 + $0x2] sm:$0x1]
        %v429 = vld [vmem:[%s344 + $0x3] sm:$0x1]
        %v430 = vld [vmem:[%s353] sm:$0xff]
        %v431 = vld [vmem:[%s353 + $0x8] sm:$0xff]
        %v432 = vld [vmem:[%s353 + $0x10] sm:$0xff]
        %v433 = vld [vmem:[%s353 + $0x18] sm:$0xff]
        %v434 = vld [vmem:[%s353 + $0x20] sm:$0xff]
        %v435 = vld [vmem:[%s353 + $0x28] sm:$0xff]
        %v436 = vld [vmem:[%s353 + $0x30] sm:$0xff]
        %v437 = vld [vmem:[%s353 + $0x38] sm:$0xff]
        %v438 = vld [vmem:[%s362] sm:$0xff]
        %v439 = vld [vmem:[%s362 + $0x8] sm:$0xff]
        %v440 = vld [vmem:[%s362 + $0x10] sm:$0xff]
        %v441 = vld [vmem:[%s362 + $0x18] sm:$0xff]
        %v442 = vld [vmem:[%s362 + $0x20] sm:$0xff]
        %v443 = vld [vmem:[%s362 + $0x28] sm:$0xff]
        %v444 = vld [vmem:[%s362 + $0x30] sm:$0xff]
        %v445 = vld [vmem:[%s362 + $0x38] sm:$0xff]
        %v446 = vld [vmem:[#allocation8] sm:$0xff]
        %v447 = vld [vmem:[#allocation8 + $0x8] sm:$0xff]
        %v448 = vld [vmem:[#allocation8 + $0x10] sm:$0xff]
        %v449 = vld [vmem:[#allocation8 + $0x18] sm:$0xff]
        %vm450 = vcmask 261120
        %v452 = vsel %vm450, %v426, 0
        %454 = vmatprep.subr.mxu0 0.0
        %455 = vmatpush1.msra.mxu0 %v446
        %456 = vmatprep.subr.mxu0 0.0
        %457 = vmatpush1.msra.mxu0 %v447
        %458 = vmatprep.subr.mxu0 0.0
        %459 = vmatpush1.msra.mxu0 %v448
        %460 = vmatprep.subr.mxu0 0.0
        %461 = vmatpush1.msra.mxu0 %v449
        %462 = vmatprep.subr.mxu0 0.0
        %463 = vmatpush1.msra.mxu0 0.0
        %464 = vmatprep.subr.mxu0 0.0
        %465 = vmatpush1.msra.mxu0 0.0
        %466 = vmatprep.subr.mxu0 0.0
        %467 = vmatpush1.msra.mxu0 0.0
        %468 = vmatprep.subr.mxu0 0.0
        %469 = vmatpush1.msra.mxu0 0.0
        %470 = vmatprep.subr.mxu0 0.0
        %471 = vmatpush1.msra.mxu0 0.0
        %472 = vmatprep.subr.mxu0 0.0
        %473 = vmatpush1.msra.mxu0 0.0
        %474 = vmatprep.subr.mxu0 0.0
        %475 = vmatpush1.msra.mxu0 0.0
        %476 = vmatprep.subr.mxu0 0.0
        %477 = vmatpush1.msra.mxu0 0.0
        %478 = vmatprep.subr.mxu0 0.0
        %479 = vmatpush1.msra.mxu0 0.0
        %480 = vmatprep.subr.mxu0 0.0
        %481 = vmatpush1.msra.mxu0 0.0
        %482 = vmatprep.subr.mxu0 0.0
        %483 = vmatpush1.msra.mxu0 0.0
        %484 = vmatprep.subr.mxu0 0.0
        %485 = vmatpush1.msra.mxu0 0.0
        %486 = vmatprep.subr.mxu0 0.0
        %487 = vmatpush1.msra.mxu0 0.0
        %488 = vmatprep.subr.mxu0 0.0
        %489 = vmatpush1.msra.mxu0 0.0
        %490 = vmatprep.subr.mxu0 0.0
        %491 = vmatpush1.msra.mxu0 0.0
        %492 = vmatprep.subr.mxu0 0.0
        %493 = vmatpush1.msra.mxu0 0.0
        %494 = vmatprep.subr.mxu0 0.0
        %495 = vmatpush1.msra.mxu0 0.0
        %496 = vmatprep.subr.mxu0 0.0
        %497 = vmatpush1.msra.mxu0 0.0
        %498 = vmatprep.subr.mxu0 0.0
        %499 = vmatpush1.msra.mxu0 0.0
        %500 = vmatprep.subr.mxu0 0.0
        %501 = vmatpush1.msra.mxu0 0.0
        %502 = vmatprep.subr.mxu0 0.0
        %503 = vmatpush1.msra.mxu0 0.0
        %504 = vmatprep.subr.mxu0 0.0
        %505 = vmatpush1.msra.mxu0 0.0
        %506 = vmatprep.subr.mxu0 0.0
        %507 = vmatpush1.msra.mxu0 0.0
        %508 = vmatprep.subr.mxu0 0.0
        %509 = vmatpush1.msra.mxu0 0.0
        %510 = vmatprep.subr.mxu0 0.0
        %511 = vmatpush1.msra.mxu0 0.0
        %512 = vmatprep.subr.mxu0 0.0
        %513 = vmatpush1.msra.mxu0 0.0
        %514 = vmatprep.subr.mxu0 0.0
        %515 = vmatpush1.msra.mxu0 0.0
        %516 = vmatprep.subr.mxu0 0.0
        %517 = vmatpush1.msra.mxu0 0.0
        %518 = vmatprep.mubr.f32.mxu0 0.0
        %519 = vmatmul.mubr.f32.gmra.mrb[0].mxu0 %v452
        %v520 = vpop.f32.mrb[0].mxu0
        %v521 = vadd.f32 0.0, %v520
        %v522 = vpop.f32.mrb[0].mxu0
        %523 = vdwg.mxu0
        %v525 = vsel %vm450, %v427, 0
        %527 = vmatprep.subr.mxu0 0.0
        %528 = vmatpush1.msra.mxu0 %v446
        %529 = vmatprep.subr.mxu0 0.0
        %530 = vmatpush1.msra.mxu0 %v447
        %531 = vmatprep.subr.mxu0 0.0
        %532 = vmatpush1.msra.mxu0 %v448
        %533 = vmatprep.subr.mxu0 0.0
        %534 = vmatpush1.msra.mxu0 %v449
        %535 = vmatprep.subr.mxu0 0.0
        %536 = vmatpush1.msra.mxu0 0.0
        %537 = vmatprep.subr.mxu0 0.0
        %538 = vmatpush1.msra.mxu0 0.0
        %539 = vmatprep.subr.mxu0 0.0
        %540 = vmatpush1.msra.mxu0 0.0
        %541 = vmatprep.subr.mxu0 0.0
        %542 = vmatpush1.msra.mxu0 0.0
        %543 = vmatprep.subr.mxu0 0.0
        %544 = vmatpush1.msra.mxu0 0.0
        %545 = vmatprep.subr.mxu0 0.0
        %546 = vmatpush1.msra.mxu0 0.0
        %547 = vmatprep.subr.mxu0 0.0
        %548 = vmatpush1.msra.mxu0 0.0
        %549 = vmatprep.subr.mxu0 0.0
        %550 = vmatpush1.msra.mxu0 0.0
        %551 = vmatprep.subr.mxu0 0.0
        %552 = vmatpush1.msra.mxu0 0.0
        %553 = vmatprep.subr.mxu0 0.0
        %554 = vmatpush1.msra.mxu0 0.0
        %555 = vmatprep.subr.mxu0 0.0
        %556 = vmatpush1.msra.mxu0 0.0
        %557 = vmatprep.subr.mxu0 0.0
        %558 = vmatpush1.msra.mxu0 0.0
        %559 = vmatprep.subr.mxu0 0.0
        %560 = vmatpush1.msra.mxu0 0.0
        %561 = vmatprep.subr.mxu0 0.0
        %562 = vmatpush1.msra.mxu0 0.0
        %563 = vmatprep.subr.mxu0 0.0
        %564 = vmatpush1.msra.mxu0 0.0
        %565 = vmatprep.subr.mxu0 0.0
        %566 = vmatpush1.msra.mxu0 0.0
        %567 = vmatprep.subr.mxu0 0.0
        %568 = vmatpush1.msra.mxu0 0.0
        %569 = vmatprep.subr.mxu0 0.0
        %570 = vmatpush1.msra.mxu0 0.0
        %571 = vmatprep.subr.mxu0 0.0
        %572 = vmatpush1.msra.mxu0 0.0
        %573 = vmatprep.subr.mxu0 0.0
        %574 = vmatpush1.msra.mxu0 0.0
        %575 = vmatprep.subr.mxu0 0.0
        %576 = vmatpush1.msra.mxu0 0.0
        %577 = vmatprep.subr.mxu0 0.0
        %578 = vmatpush1.msra.mxu0 0.0
        %579 = vmatprep.subr.mxu0 0.0
        %580 = vmatpush1.msra.mxu0 0.0
        %581 = vmatprep.subr.mxu0 0.0
        %582 = vmatpush1.msra.mxu0 0.0
        %583 = vmatprep.subr.mxu0 0.0
        %584 = vmatpush1.msra.mxu0 0.0
        %585 = vmatprep.subr.mxu0 0.0
        %586 = vmatpush1.msra.mxu0 0.0
        %587 = vmatprep.subr.mxu0 0.0
        %588 = vmatpush1.msra.mxu0 0.0
        %589 = vmatprep.subr.mxu0 0.0
        %590 = vmatpush1.msra.mxu0 0.0
        %591 = vmatprep.mubr.f32.mxu0 0.0
        %592 = vmatmul.mubr.f32.gmra.mrb[0].mxu0 %v525
        %v593 = vpop.f32.mrb[0].mxu0
        %v594 = vadd.f32 0.0, %v593
        %v595 = vpop.f32.mrb[0].mxu0
        %596 = vdwg.mxu0
        %v598 = vsel %vm450, %v428, 0
        %600 = vmatprep.subr.mxu0 0.0
        %601 = vmatpush1.msra.mxu0 %v446
        %602 = vmatprep.subr.mxu0 0.0
        %603 = vmatpush1.msra.mxu0 %v447
        %604 = vmatprep.subr.mxu0 0.0
        %605 = vmatpush1.msra.mxu0 %v448
        %606 = vmatprep.subr.mxu0 0.0
        %607 = vmatpush1.msra.mxu0 %v449
        %608 = vmatprep.subr.mxu0 0.0
        %609 = vmatpush1.msra.mxu0 0.0
        %610 = vmatprep.subr.mxu0 0.0
        %611 = vmatpush1.msra.mxu0 0.0
        %612 = vmatprep.subr.mxu0 0.0
        %613 = vmatpush1.msra.mxu0 0.0
        %614 = vmatprep.subr.mxu0 0.0
        %615 = vmatpush1.msra.mxu0 0.0
        %616 = vmatprep.subr.mxu0 0.0
        %617 = vmatpush1.msra.mxu0 0.0
        %618 = vmatprep.subr.mxu0 0.0
        %619 = vmatpush1.msra.mxu0 0.0
        %620 = vmatprep.subr.mxu0 0.0
        %621 = vmatpush1.msra.mxu0 0.0
        %622 = vmatprep.subr.mxu0 0.0
        %623 = vmatpush1.msra.mxu0 0.0
        %624 = vmatprep.subr.mxu0 0.0
        %625 = vmatpush1.msra.mxu0 0.0
        %626 = vmatprep.subr.mxu0 0.0
        %627 = vmatpush1.msra.mxu0 0.0
        %628 = vmatprep.subr.mxu0 0.0
        %629 = vmatpush1.msra.mxu0 0.0
        %630 = vmatprep.subr.mxu0 0.0
        %631 = vmatpush1.msra.mxu0 0.0
        %632 = vmatprep.subr.mxu0 0.0
        %633 = vmatpush1.msra.mxu0 0.0
        %634 = vmatprep.subr.mxu0 0.0
        %635 = vmatpush1.msra.mxu0 0.0
        %636 = vmatprep.subr.mxu0 0.0
        %637 = vmatpush1.msra.mxu0 0.0
        %638 = vmatprep.subr.mxu0 0.0
        %639 = vmatpush1.msra.mxu0 0.0
        %640 = vmatprep.subr.mxu0 0.0
        %641 = vmatpush1.msra.mxu0 0.0
        %642 = vmatprep.subr.mxu0 0.0
        %643 = vmatpush1.msra.mxu0 0.0
        %644 = vmatprep.subr.mxu0 0.0
        %645 = vmatpush1.msra.mxu0 0.0
        %646 = vmatprep.subr.mxu0 0.0
        %647 = vmatpush1.msra.mxu0 0.0
        %648 = vmatprep.subr.mxu0 0.0
        %649 = vmatpush1.msra.mxu0 0.0
        %650 = vmatprep.subr.mxu0 0.0
        %651 = vmatpush1.msra.mxu0 0.0
        %652 = vmatprep.subr.mxu0 0.0
        %653 = vmatpush1.msra.mxu0 0.0
        %654 = vmatprep.subr.mxu0 0.0
        %655 = vmatpush1.msra.mxu0 0.0
        %656 = vmatprep.subr.mxu0 0.0
        %657 = vmatpush1.msra.mxu0 0.0
        %658 = vmatprep.subr.mxu0 0.0
        %659 = vmatpush1.msra.mxu0 0.0
        %660 = vmatprep.subr.mxu0 0.0
        %661 = vmatpush1.msra.mxu0 0.0
        %662 = vmatprep.subr.mxu0 0.0
        %663 = vmatpush1.msra.mxu0 0.0
        %664 = vmatprep.mubr.f32.mxu0 0.0
        %665 = vmatmul.mubr.f32.gmra.mrb[0].mxu0 %v598
        %v666 = vpop.f32.mrb[0].mxu0
        %v667 = vadd.f32 0.0, %v666
        %v668 = vpop.f32.mrb[0].mxu0
        %669 = vdwg.mxu0
        %v671 = vsel %vm450, %v429, 0
        %673 = vmatprep.subr.mxu0 0.0
        %674 = vmatpush1.msra.mxu0 %v446
        %675 = vmatprep.subr.mxu0 0.0
        %676 = vmatpush1.msra.mxu0 %v447
        %677 = vmatprep.subr.mxu0 0.0
        %678 = vmatpush1.msra.mxu0 %v448
        %679 = vmatprep.subr.mxu0 0.0
        %680 = vmatpush1.msra.mxu0 %v449
        %681 = vmatprep.subr.mxu0 0.0
        %682 = vmatpush1.msra.mxu0 0.0
        %683 = vmatprep.subr.mxu0 0.0
        %684 = vmatpush1.msra.mxu0 0.0
        %685 = vmatprep.subr.mxu0 0.0
        %686 = vmatpush1.msra.mxu0 0.0
        %687 = vmatprep.subr.mxu0 0.0
        %688 = vmatpush1.msra.mxu0 0.0
        %689 = vmatprep.subr.mxu0 0.0
        %690 = vmatpush1.msra.mxu0 0.0
        %691 = vmatprep.subr.mxu0 0.0
        %692 = vmatpush1.msra.mxu0 0.0
        %693 = vmatprep.subr.mxu0 0.0
        %694 = vmatpush1.msra.mxu0 0.0
        %695 = vmatprep.subr.mxu0 0.0
        %696 = vmatpush1.msra.mxu0 0.0
        %697 = vmatprep.subr.mxu0 0.0
        %698 = vmatpush1.msra.mxu0 0.0
        %699 = vmatprep.subr.mxu0 0.0
        %700 = vmatpush1.msra.mxu0 0.0
        %701 = vmatprep.subr.mxu0 0.0
        %702 = vmatpush1.msra.mxu0 0.0
        %703 = vmatprep.subr.mxu0 0.0
        %704 = vmatpush1.msra.mxu0 0.0
        %705 = vmatprep.subr.mxu0 0.0
        %706 = vmatpush1.msra.mxu0 0.0
        %707 = vmatprep.subr.mxu0 0.0
        %708 = vmatpush1.msra.mxu0 0.0
        %709 = vmatprep.subr.mxu0 0.0
        %710 = vmatpush1.msra.mxu0 0.0
        %711 = vmatprep.subr.mxu0 0.0
        %712 = vmatpush1.msra.mxu0 0.0
        %713 = vmatprep.subr.mxu0 0.0
        %714 = vmatpush1.msra.mxu0 0.0
        %715 = vmatprep.subr.mxu0 0.0
        %716 = vmatpush1.msra.mxu0 0.0
        %717 = vmatprep.subr.mxu0 0.0
        %718 = vmatpush1.msra.mxu0 0.0
        %719 = vmatprep.subr.mxu0 0.0
        %720 = vmatpush1.msra.mxu0 0.0
        %721 = vmatprep.subr.mxu0 0.0
        %722 = vmatpush1.msra.mxu0 0.0
        %723 = vmatprep.subr.mxu0 0.0
        %724 = vmatpush1.msra.mxu0 0.0
        %725 = vmatprep.subr.mxu0 0.0
        %726 = vmatpush1.msra.mxu0 0.0
        %727 = vmatprep.subr.mxu0 0.0
        %728 = vmatpush1.msra.mxu0 0.0
        %729 = vmatprep.subr.mxu0 0.0
        %730 = vmatpush1.msra.mxu0 0.0
        %731 = vmatprep.subr.mxu0 0.0
        %732 = vmatpush1.msra.mxu0 0.0
        %733 = vmatprep.subr.mxu0 0.0
        %734 = vmatpush1.msra.mxu0 0.0
        %735 = vmatprep.subr.mxu0 0.0
        %736 = vmatpush1.msra.mxu0 0.0
        %737 = vmatprep.mubr.f32.mxu0 0.0
        %738 = vmatmul.mubr.f32.gmra.mrb[0].mxu0 %v671
        %v739 = vpop.f32.mrb[0].mxu0
        %v740 = vadd.f32 0.0, %v739
        %v741 = vpop.f32.mrb[0].mxu0
        %742 = vdwg.mxu0
        %v743 = vlaneseq
        %v744 = vshrl.u32 %v743, 7
        %v745 = vsub.s32 0, %v744
        %v746 = vrot.slane %v521, %v745
        %v747 = vlaneseq
        %v748 = vshrl.u32 %v747, 7
        %v749 = vsub.s32 0, %v748
        %v750 = vrot.slane %v594, %v749
        %v751 = vlaneseq
        %v752 = vshrl.u32 %v751, 7
        %v753 = vsub.s32 0, %v752
        %v754 = vrot.slane %v667, %v753
        %v755 = vlaneseq
        %v756 = vshrl.u32 %v755, 7
        %v757 = vsub.s32 0, %v756
        %v758 = vrot.slane %v740, %v757
        %v759 = vadd.f32 %v746, %v430
        %v760 = vadd.f32 %v746, %v431
        %v761 = vadd.f32 %v750, %v432
        %v762 = vadd.f32 %v750, %v433
        %v763 = vadd.f32 %v754, %v434
        %v764 = vadd.f32 %v754, %v435
        %v765 = vadd.f32 %v758, %v436
        %v766 = vadd.f32 %v758, %v437
        %v767 = vtanh.pop %v759
        %v768 = vtanh.pop %v760
        %v769 = vtanh.pop %v761
        %v770 = vtanh.pop %v762
        %v771 = vtanh.pop %v763
        %v772 = vtanh.pop %v764
        %v773 = vtanh.pop %v765
        %v774 = vtanh.pop %v766
        %v775 = vld [vmem:[%s5] sm:$0x1]
        %v777 = vsel %vm450, %v775, 0
        %v780 = vsel %vm450, %v767, 0
        %v783 = vsel %vm450, %v768, 0
        %785 = vmatprep.subr.mxu0 0.0
        %786 = vmatpush1.xpose.msra.mxu0 %v780
        %787 = vmatprep.subr.mxu0 0.0
        %788 = vmatpush1.xpose.msra.mxu0 %v783
        %789 = vmatprep.subr.mxu0 0.0
        %790 = vmatpush1.xpose.msra.mxu0 0.0
        %791 = vmatprep.subr.mxu0 0.0
        %792 = vmatpush1.xpose.msra.mxu0 0.0
        %793 = vmatprep.subr.mxu0 0.0
        %794 = vmatpush1.xpose.msra.mxu0 0.0
        %795 = vmatprep.subr.mxu0 0.0
        %796 = vmatpush1.xpose.msra.mxu0 0.0
        %797 = vmatprep.subr.mxu0 0.0
        %798 = vmatpush1.xpose.msra.mxu0 0.0
        %799 = vmatprep.subr.mxu0 0.0
        %800 = vmatpush1.xpose.msra.mxu0 0.0
        %801 = vmatprep.subr.mxu0 0.0
        %802 = vmatpush1.xpose.msra.mxu0 0.0
        %803 = vmatprep.subr.mxu0 0.0
        %804 = vmatpush1.xpose.msra.mxu0 0.0
        %805 = vmatprep.subr.mxu0 0.0
        %806 = vmatpush1.xpose.msra.mxu0 0.0
        %807 = vmatprep.subr.mxu0 0.0
        %808 = vmatpush1.xpose.msra.mxu0 0.0
        %809 = vmatprep.subr.mxu0 0.0
        %810 = vmatpush1.xpose.msra.mxu0 0.0
        %811 = vmatprep.subr.mxu0 0.0
        %812 = vmatpush1.xpose.msra.mxu0 0.0
        %813 = vmatprep.subr.mxu0 0.0
        %814 = vmatpush1.xpose.msra.mxu0 0.0
        %815 = vmatprep.subr.mxu0 0.0
        %816 = vmatpush1.xpose.msra.mxu0 0.0
        %817 = vmatprep.subr.mxu0 0.0
        %818 = vmatpush1.xpose.msra.mxu0 0.0
        %819 = vmatprep.subr.mxu0 0.0
        %820 = vmatpush1.xpose.msra.mxu0 0.0
        %821 = vmatprep.subr.mxu0 0.0
        %822 = vmatpush1.xpose.msra.mxu0 0.0
        %823 = vmatprep.subr.mxu0 0.0
        %824 = vmatpush1.xpose.msra.mxu0 0.0
        %825 = vmatprep.subr.mxu0 0.0
        %826 = vmatpush1.xpose.msra.mxu0 0.0
        %827 = vmatprep.subr.mxu0 0.0
        %828 = vmatpush1.xpose.msra.mxu0 0.0
        %829 = vmatprep.subr.mxu0 0.0
        %830 = vmatpush1.xpose.msra.mxu0 0.0
        %831 = vmatprep.subr.mxu0 0.0
        %832 = vmatpush1.xpose.msra.mxu0 0.0
        %833 = vmatprep.subr.mxu0 0.0
        %834 = vmatpush1.xpose.msra.mxu0 0.0
        %835 = vmatprep.subr.mxu0 0.0
        %836 = vmatpush1.xpose.msra.mxu0 0.0
        %837 = vmatprep.subr.mxu0 0.0
        %838 = vmatpush1.xpose.msra.mxu0 0.0
        %839 = vmatprep.subr.mxu0 0.0
        %840 = vmatpush1.xpose.msra.mxu0 0.0
        %841 = vmatprep.subr.mxu0 0.0
        %842 = vmatpush1.xpose.msra.mxu0 0.0
        %843 = vmatprep.subr.mxu0 0.0
        %844 = vmatpush1.xpose.msra.mxu0 0.0
        %845 = vmatprep.subr.mxu0 0.0
        %846 = vmatpush1.xpose.msra.mxu0 0.0
        %847 = vmatprep.subr.mxu0 0.0
        %848 = vmatpush1.xpose.msra.mxu0 0.0
        %849 = vmatprep.mubr.f32.mxu0 0.0
        %850 = vmatmul.mubr.f32.gmra.mrb[0].mxu0 %v777
        %v851 = vpop.f32.mrb[0].mxu0
        %v852 = vadd.f32 0.0, %v851
        %v853 = vpop.f32.mrb[0].mxu0
        %854 = vdwg.mxu0
        %v856 = vsel %vm450, %v769, 0
        %v859 = vsel %vm450, %v770, 0
        %861 = vmatprep.subr.mxu0 0.0
        %862 = vmatpush1.xpose.msra.mxu0 %v856
        %863 = vmatprep.subr.mxu0 0.0
        %864 = vmatpush1.xpose.msra.mxu0 %v859
        %865 = vmatprep.subr.mxu0 0.0
        %866 = vmatpush1.xpose.msra.mxu0 0.0
        %867 = vmatprep.subr.mxu0 0.0
        %868 = vmatpush1.xpose.msra.mxu0 0.0
        %869 = vmatprep.subr.mxu0 0.0
        %870 = vmatpush1.xpose.msra.mxu0 0.0
        %871 = vmatprep.subr.mxu0 0.0
        %872 = vmatpush1.xpose.msra.mxu0 0.0
        %873 = vmatprep.subr.mxu0 0.0
        %874 = vmatpush1.xpose.msra.mxu0 0.0
        %875 = vmatprep.subr.mxu0 0.0
        %876 = vmatpush1.xpose.msra.mxu0 0.0
        %877 = vmatprep.subr.mxu0 0.0
        %878 = vmatpush1.xpose.msra.mxu0 0.0
        %879 = vmatprep.subr.mxu0 0.0
        %880 = vmatpush1.xpose.msra.mxu0 0.0
        %881 = vmatprep.subr.mxu0 0.0
        %882 = vmatpush1.xpose.msra.mxu0 0.0
        %883 = vmatprep.subr.mxu0 0.0
        %884 = vmatpush1.xpose.msra.mxu0 0.0
        %885 = vmatprep.subr.mxu0 0.0
        %886 = vmatpush1.xpose.msra.mxu0 0.0
        %887 = vmatprep.subr.mxu0 0.0
        %888 = vmatpush1.xpose.msra.mxu0 0.0
        %889 = vmatprep.subr.mxu0 0.0
        %890 = vmatpush1.xpose.msra.mxu0 0.0
        %891 = vmatprep.subr.mxu0 0.0
        %892 = vmatpush1.xpose.msra.mxu0 0.0
        %893 = vmatprep.subr.mxu0 0.0
        %894 = vmatpush1.xpose.msra.mxu0 0.0
        %895 = vmatprep.subr.mxu0 0.0
        %896 = vmatpush1.xpose.msra.mxu0 0.0
        %897 = vmatprep.subr.mxu0 0.0
        %898 = vmatpush1.xpose.msra.mxu0 0.0
        %899 = vmatprep.subr.mxu0 0.0
        %900 = vmatpush1.xpose.msra.mxu0 0.0
        %901 = vmatprep.subr.mxu0 0.0
        %902 = vmatpush1.xpose.msra.mxu0 0.0
        %903 = vmatprep.subr.mxu0 0.0
        %904 = vmatpush1.xpose.msra.mxu0 0.0
        %905 = vmatprep.subr.mxu0 0.0
        %906 = vmatpush1.xpose.msra.mxu0 0.0
        %907 = vmatprep.subr.mxu0 0.0
        %908 = vmatpush1.xpose.msra.mxu0 0.0
        %909 = vmatprep.subr.mxu0 0.0
        %910 = vmatpush1.xpose.msra.mxu0 0.0
        %911 = vmatprep.subr.mxu0 0.0
        %912 = vmatpush1.xpose.msra.mxu0 0.0
        %913 = vmatprep.subr.mxu0 0.0
        %914 = vmatpush1.xpose.msra.mxu0 0.0
        %915 = vmatprep.subr.mxu0 0.0
        %916 = vmatpush1.xpose.msra.mxu0 0.0
        %917 = vmatprep.subr.mxu0 0.0
        %918 = vmatpush1.xpose.msra.mxu0 0.0
        %919 = vmatprep.subr.mxu0 0.0
        %920 = vmatpush1.xpose.msra.mxu0 0.0
        %921 = vmatprep.subr.mxu0 0.0
        %922 = vmatpush1.xpose.msra.mxu0 0.0
        %923 = vmatprep.subr.mxu0 0.0
        %924 = vmatpush1.xpose.msra.mxu0 0.0
        %925 = vmatprep.mubr.f32.mxu0 0.0
        %926 = vmatmul.mubr.f32.gmra.mrb[0].mxu0 %v777
        %v927 = vpop.f32.mrb[0].mxu0
        %v928 = vadd.f32 0.0, %v927
        %v929 = vpop.f32.mrb[0].mxu0
        %930 = vdwg.mxu0
        %v932 = vsel %vm450, %v771, 0
        %v935 = vsel %vm450, %v772, 0
        %937 = vmatprep.subr.mxu0 0.0
        %938 = vmatpush1.xpose.msra.mxu0 %v932
        %939 = vmatprep.subr.mxu0 0.0
        %940 = vmatpush1.xpose.msra.mxu0 %v935
        %941 = vmatprep.subr.mxu0 0.0
        %942 = vmatpush1.xpose.msra.mxu0 0.0
        %943 = vmatprep.subr.mxu0 0.0
        %944 = vmatpush1.xpose.msra.mxu0 0.0
        %945 = vmatprep.subr.mxu0 0.0
        %946 = vmatpush1.xpose.msra.mxu0 0.0
        %947 = vmatprep.subr.mxu0 0.0
        %948 = vmatpush1.xpose.msra.mxu0 0.0
        %949 = vmatprep.subr.mxu0 0.0
        %950 = vmatpush1.xpose.msra.mxu0 0.0
        %951 = vmatprep.subr.mxu0 0.0
        %952 = vmatpush1.xpose.msra.mxu0 0.0
        %953 = vmatprep.subr.mxu0 0.0
        %954 = vmatpush1.xpose.msra.mxu0 0.0
        %955 = vmatprep.subr.mxu0 0.0
        %956 = vmatpush1.xpose.msra.mxu0 0.0
        %957 = vmatprep.subr.mxu0 0.0
        %958 = vmatpush1.xpose.msra.mxu0 0.0
        %959 = vmatprep.subr.mxu0 0.0
        %960 = vmatpush1.xpose.msra.mxu0 0.0
        %961 = vmatprep.subr.mxu0 0.0
        %962 = vmatpush1.xpose.msra.mxu0 0.0
        %963 = vmatprep.subr.mxu0 0.0
        %964 = vmatpush1.xpose.msra.mxu0 0.0
        %965 = vmatprep.subr.mxu0 0.0
        %966 = vmatpush1.xpose.msra.mxu0 0.0
        %967 = vmatprep.subr.mxu0 0.0
        %968 = vmatpush1.xpose.msra.mxu0 0.0
        %969 = vmatprep.subr.mxu0 0.0
        %970 = vmatpush1.xpose.msra.mxu0 0.0
        %971 = vmatprep.subr.mxu0 0.0
        %972 = vmatpush1.xpose.msra.mxu0 0.0
        %973 = vmatprep.subr.mxu0 0.0
        %974 = vmatpush1.xpose.msra.mxu0 0.0
        %975 = vmatprep.subr.mxu0 0.0
        %976 = vmatpush1.xpose.msra.mxu0 0.0
        %977 = vmatprep.subr.mxu0 0.0
        %978 = vmatpush1.xpose.msra.mxu0 0.0
        %979 = vmatprep.subr.mxu0 0.0
        %980 = vmatpush1.xpose.msra.mxu0 0.0
        %981 = vmatprep.subr.mxu0 0.0
        %982 = vmatpush1.xpose.msra.mxu0 0.0
        %983 = vmatprep.subr.mxu0 0.0
        %984 = vmatpush1.xpose.msra.mxu0 0.0
        %985 = vmatprep.subr.mxu0 0.0
        %986 = vmatpush1.xpose.msra.mxu0 0.0
        %987 = vmatprep.subr.mxu0 0.0
        %988 = vmatpush1.xpose.msra.mxu0 0.0
        %989 = vmatprep.subr.mxu0 0.0
        %990 = vmatpush1.xpose.msra.mxu0 0.0
        %991 = vmatprep.subr.mxu0 0.0
        %992 = vmatpush1.xpose.msra.mxu0 0.0
        %993 = vmatprep.subr.mxu0 0.0
        %994 = vmatpush1.xpose.msra.mxu0 0.0
        %995 = vmatprep.subr.mxu0 0.0
        %996 = vmatpush1.xpose.msra.mxu0 0.0
        %997 = vmatprep.subr.mxu0 0.0
        %998 = vmatpush1.xpose.msra.mxu0 0.0
        %999 = vmatprep.subr.mxu0 0.0
        %1000 = vmatpush1.xpose.msra.mxu0 0.0
        %1001 = vmatprep.mubr.f32.mxu0 0.0
        %1002 = vmatmul.mubr.f32.gmra.mrb[0].mxu0 %v777
        %v1003 = vpop.f32.mrb[0].mxu0
        %v1004 = vadd.f32 0.0, %v1003
        %v1005 = vpop.f32.mrb[0].mxu0
        %1006 = vdwg.mxu0
        %v1008 = vsel %vm450, %v773, 0
        %v1011 = vsel %vm450, %v774, 0
        %1013 = vmatprep.subr.mxu0 0.0
        %1014 = vmatpush1.xpose.msra.mxu0 %v1008
        %1015 = vmatprep.subr.mxu0 0.0
        %1016 = vmatpush1.xpose.msra.mxu0 %v1011
        %1017 = vmatprep.subr.mxu0 0.0
        %1018 = vmatpush1.xpose.msra.mxu0 0.0
        %1019 = vmatprep.subr.mxu0 0.0
        %1020 = vmatpush1.xpose.msra.mxu0 0.0
        %1021 = vmatprep.subr.mxu0 0.0
        %1022 = vmatpush1.xpose.msra.mxu0 0.0
        %1023 = vmatprep.subr.mxu0 0.0
        %1024 = vmatpush1.xpose.msra.mxu0 0.0
        %1025 = vmatprep.subr.mxu0 0.0
        %1026 = vmatpush1.xpose.msra.mxu0 0.0
        %1027 = vmatprep.subr.mxu0 0.0
        %1028 = vmatpush1.xpose.msra.mxu0 0.0
        %1029 = vmatprep.subr.mxu0 0.0
        %1030 = vmatpush1.xpose.msra.mxu0 0.0
        %1031 = vmatprep.subr.mxu0 0.0
        %1032 = vmatpush1.xpose.msra.mxu0 0.0
        %1033 = vmatprep.subr.mxu0 0.0
        %1034 = vmatpush1.xpose.msra.mxu0 0.0
        %1035 = vmatprep.subr.mxu0 0.0
        %1036 = vmatpush1.xpose.msra.mxu0 0.0
        %1037 = vmatprep.subr.mxu0 0.0
        %1038 = vmatpush1.xpose.msra.mxu0 0.0
        %1039 = vmatprep.subr.mxu0 0.0
        %1040 = vmatpush1.xpose.msra.mxu0 0.0
        %1041 = vmatprep.subr.mxu0 0.0
        %1042 = vmatpush1.xpose.msra.mxu0 0.0
        %1043 = vmatprep.subr.mxu0 0.0
        %1044 = vmatpush1.xpose.msra.mxu0 0.0
        %1045 = vmatprep.subr.mxu0 0.0
        %1046 = vmatpush1.xpose.msra.mxu0 0.0
        %1047 = vmatprep.subr.mxu0 0.0
        %1048 = vmatpush1.xpose.msra.mxu0 0.0
        %1049 = vmatprep.subr.mxu0 0.0
        %1050 = vmatpush1.xpose.msra.mxu0 0.0
        %1051 = vmatprep.subr.mxu0 0.0
        %1052 = vmatpush1.xpose.msra.mxu0 0.0
        %1053 = vmatprep.subr.mxu0 0.0
        %1054 = vmatpush1.xpose.msra.mxu0 0.0
        %1055 = vmatprep.subr.mxu0 0.0
        %1056 = vmatpush1.xpose.msra.mxu0 0.0
        %1057 = vmatprep.subr.mxu0 0.0
        %1058 = vmatpush1.xpose.msra.mxu0 0.0
        %1059 = vmatprep.subr.mxu0 0.0
        %1060 = vmatpush1.xpose.msra.mxu0 0.0
        %1061 = vmatprep.subr.mxu0 0.0
        %1062 = vmatpush1.xpose.msra.mxu0 0.0
        %1063 = vmatprep.subr.mxu0 0.0
        %1064 = vmatpush1.xpose.msra.mxu0 0.0
        %1065 = vmatprep.subr.mxu0 0.0
        %1066 = vmatpush1.xpose.msra.mxu0 0.0
        %1067 = vmatprep.subr.mxu0 0.0
        %1068 = vmatpush1.xpose.msra.mxu0 0.0
        %1069 = vmatprep.subr.mxu0 0.0
        %1070 = vmatpush1.xpose.msra.mxu0 0.0
        %1071 = vmatprep.subr.mxu0 0.0
        %1072 = vmatpush1.xpose.msra.mxu0 0.0
        %1073 = vmatprep.subr.mxu0 0.0
        %1074 = vmatpush1.xpose.msra.mxu0 0.0
        %1075 = vmatprep.subr.mxu0 0.0
        %1076 = vmatpush1.xpose.msra.mxu0 0.0
        %1077 = vmatprep.mubr.f32.mxu0 0.0
        %1078 = vmatmul.mubr.f32.gmra.mrb[0].mxu0 %v777
        %v1079 = vpop.f32.mrb[0].mxu0
        %v1080 = vadd.f32 0.0, %v1079
        %v1081 = vpop.f32.mrb[0].mxu0
        %1082 = vdwg.mxu0
        %v1083 = vld [vmem:[%s422] sm:$0x1]
        %v1084 = vld [vmem:[%s422 + $0x1] sm:$0x1]
        %v1085 = vld [vmem:[%s422 + $0x2] sm:$0x1]
        %v1086 = vld [vmem:[%s422 + $0x3] sm:$0x1]
        %vm1087 = vcmp.eq.s32.totalorder %v1083, 0
        %vm1088 = vcmp.eq.s32.totalorder %v1084, 0
        %vm1089 = vcmp.eq.s32.totalorder %v1085, 0
        %vm1090 = vcmp.eq.s32.totalorder %v1086, 0
        %v1091 = vsel %vm1087, -inf, %v852
        %v1092 = vsel %vm1088, -inf, %v928
        %v1093 = vsel %vm1089, -inf, %v1004
        %v1094 = vsel %vm1090, -inf, %v1080
        %vm1095 = vcmask 122880
        %v1096 = vsel %vm1095, %v1091, -inf
        %1097 = vmax.xlane.f32.xlu0 %v1096
        %v1098 = vpop.xlane.xlu0 %1097
        %v1099 = vsel %vm1095, %v1092, -inf
        %1100 = vmax.xlane.f32.xlu0 %v1099
        %v1101 = vpop.xlane.xlu0 %1100
        %v1102 = vsel %vm1095, %v1093, -inf
        %1103 = vmax.xlane.f32.xlu0 %v1102
        %v1104 = vpop.xlane.xlu0 %1103
        %v1105 = vsel %vm1095, %v1094, -inf
        %1106 = vmax.xlane.f32.xlu0 %v1105
        %v1107 = vpop.xlane.xlu0 %1106
        %v1108 = vsub.f32 %v1091, %v1098
        %v1109 = vsub.f32 %v1092, %v1101
        %v1110 = vsub.f32 %v1093, %v1104
        %v1111 = vsub.f32 %v1094, %v1107
        %v1112 = vmul.f32 %v1108, 1.442695
        %v1113 = vpow.pop %v1112
        %v1114 = vmul.f32 %v1109, 1.442695
        %v1115 = vpow.pop %v1114
        %v1116 = vmul.f32 %v1110, 1.442695
        %v1117 = vpow.pop %v1116
        %v1118 = vmul.f32 %v1111, 1.442695
        %v1119 = vpow.pop %v1118
        %v1120 = vsel %vm1095, %v1113, 0.0
        %1121 = vadd.xlane.f32.xlu0 %v1120
        %v1122 = vpop.xlane.xlu0 %1121
        %v1123 = vsel %vm1095, %v1115, 0.0
        %1124 = vadd.xlane.f32.xlu0 %v1123
        %v1125 = vpop.xlane.xlu0 %1124
        %v1126 = vsel %vm1095, %v1117, 0.0
        %1127 = vadd.xlane.f32.xlu0 %v1126
        %v1128 = vpop.xlane.xlu0 %1127
        %v1129 = vsel %vm1095, %v1119, 0.0
        %1130 = vadd.xlane.f32.xlu0 %v1129
        %v1131 = vpop.xlane.xlu0 %1130
        %v1132 = vrcp.pop %v1122
        %v1133 = vrcp.pop %v1125
        %v1134 = vrcp.pop %v1128
        %v1135 = vrcp.pop %v1131
        %v1136 = vmul.f32 %v1113, %v1132
        %v1137 = vmul.f32 %v1115, %v1133
        %v1138 = vmul.f32 %v1117, %v1134
        %v1139 = vmul.f32 %v1119, %v1135
        %1140 = vst.msk [vmem:[%s415] sm:$0x1] %vm1095, %v1136
        %1141 = vst.msk [vmem:[%s415 + $0x1] sm:$0x1] %vm1095, %v1137
        %1142 = vst.msk [vmem:[%s415 + $0x2] sm:$0x1] %vm1095, %v1138
        %1143 = vst.msk [vmem:[%s415 + $0x3] sm:$0x1] %vm1095, %v1139
        %vm1144 = vcmask 130048
        %v1146 = vsel %vm1144, %v1136, 0
        %1148 = vmatprep.subr.mxu0 0.0
        %1149 = vmatpush1.msra.mxu0 %v438
        %1150 = vmatprep.subr.mxu0 0.0
        %1151 = vmatpush1.msra.mxu0 %v439
        %1152 = vmatprep.subr.mxu0 0.0
        %1153 = vmatpush1.msra.mxu0 0.0
        %1154 = vmatprep.subr.mxu0 0.0
        %1155 = vmatpush1.msra.mxu0 0.0
        %1156 = vmatprep.subr.mxu0 0.0
        %1157 = vmatpush1.msra.mxu0 0.0
        %1158 = vmatprep.subr.mxu0 0.0
        %1159 = vmatpush1.msra.mxu0 0.0
        %1160 = vmatprep.subr.mxu0 0.0
        %1161 = vmatpush1.msra.mxu0 0.0
        %1162 = vmatprep.subr.mxu0 0.0
        %1163 = vmatpush1.msra.mxu0 0.0
        %1164 = vmatprep.subr.mxu0 0.0
        %1165 = vmatpush1.msra.mxu0 0.0
        %1166 = vmatprep.subr.mxu0 0.0
        %1167 = vmatpush1.msra.mxu0 0.0
        %1168 = vmatprep.subr.mxu0 0.0
        %1169 = vmatpush1.msra.mxu0 0.0
        %1170 = vmatprep.subr.mxu0 0.0
        %1171 = vmatpush1.msra.mxu0 0.0
        %1172 = vmatprep.subr.mxu0 0.0
        %1173 = vmatpush1.msra.mxu0 0.0
        %1174 = vmatprep.subr.mxu0 0.0
        %1175 = vmatpush1.msra.mxu0 0.0
        %1176 = vmatprep.subr.mxu0 0.0
        %1177 = vmatpush1.msra.mxu0 0.0
        %1178 = vmatprep.subr.mxu0 0.0
        %1179 = vmatpush1.msra.mxu0 0.0
        %1180 = vmatprep.subr.mxu0 0.0
        %1181 = vmatpush1.msra.mxu0 0.0
        %1182 = vmatprep.subr.mxu0 0.0
        %1183 = vmatpush1.msra.mxu0 0.0
        %1184 = vmatprep.subr.mxu0 0.0
        %1185 = vmatpush1.msra.mxu0 0.0
        %1186 = vmatprep.subr.mxu0 0.0
        %1187 = vmatpush1.msra.mxu0 0.0
        %1188 = vmatprep.subr.mxu0 0.0
        %1189 = vmatpush1.msra.mxu0 0.0
        %1190 = vmatprep.subr.mxu0 0.0
        %1191 = vmatpush1.msra.mxu0 0.0
        %1192 = vmatprep.subr.mxu0 0.0
        %1193 = vmatpush1.msra.mxu0 0.0
        %1194 = vmatprep.subr.mxu0 0.0
        %1195 = vmatpush1.msra.mxu0 0.0
        %1196 = vmatprep.subr.mxu0 0.0
        %1197 = vmatpush1.msra.mxu0 0.0
        %1198 = vmatprep.subr.mxu0 0.0
        %1199 = vmatpush1.msra.mxu0 0.0
        %1200 = vmatprep.subr.mxu0 0.0
        %1201 = vmatpush1.msra.mxu0 0.0
        %1202 = vmatprep.subr.mxu0 0.0
        %1203 = vmatpush1.msra.mxu0 0.0
        %1204 = vmatprep.subr.mxu0 0.0
        %1205 = vmatpush1.msra.mxu0 0.0
        %1206 = vmatprep.subr.mxu0 0.0
        %1207 = vmatpush1.msra.mxu0 0.0
        %1208 = vmatprep.subr.mxu0 0.0
        %1209 = vmatpush1.msra.mxu0 0.0
        %1210 = vmatprep.subr.mxu0 0.0
        %1211 = vmatpush1.msra.mxu0 0.0
        %1212 = vmatprep.mubr.f32.mxu0 0.0
        %1213 = vmatmul.mubr.f32.gmra.mrb[0].mxu0 %v1146
        %v1214 = vpop.f32.mrb[0].mxu0
        %v1215 = vadd.f32 0.0, %v1214
        %v1216 = vpop.f32.mrb[0].mxu0
        %1217 = vdwg.mxu0
        %v1219 = vsel %vm1144, %v1137, 0
        %1221 = vmatprep.subr.mxu0 0.0
        %1222 = vmatpush1.msra.mxu0 %v440
        %1223 = vmatprep.subr.mxu0 0.0
        %1224 = vmatpush1.msra.mxu0 %v441
        %1225 = vmatprep.subr.mxu0 0.0
        %1226 = vmatpush1.msra.mxu0 0.0
        %1227 = vmatprep.subr.mxu0 0.0
        %1228 = vmatpush1.msra.mxu0 0.0
        %1229 = vmatprep.subr.mxu0 0.0
        %1230 = vmatpush1.msra.mxu0 0.0
        %1231 = vmatprep.subr.mxu0 0.0
        %1232 = vmatpush1.msra.mxu0 0.0
        %1233 = vmatprep.subr.mxu0 0.0
        %1234 = vmatpush1.msra.mxu0 0.0
        %1235 = vmatprep.subr.mxu0 0.0
        %1236 = vmatpush1.msra.mxu0 0.0
        %1237 = vmatprep.subr.mxu0 0.0
        %1238 = vmatpush1.msra.mxu0 0.0
        %1239 = vmatprep.subr.mxu0 0.0
        %1240 = vmatpush1.msra.mxu0 0.0
        %1241 = vmatprep.subr.mxu0 0.0
        %1242 = vmatpush1.msra.mxu0 0.0
        %1243 = vmatprep.subr.mxu0 0.0
        %1244 = vmatpush1.msra.mxu0 0.0
        %1245 = vmatprep.subr.mxu0 0.0
        %1246 = vmatpush1.msra.mxu0 0.0
        %1247 = vmatprep.subr.mxu0 0.0
        %1248 = vmatpush1.msra.mxu0 0.0
        %1249 = vmatprep.subr.mxu0 0.0
        %1250 = vmatpush1.msra.mxu0 0.0
        %1251 = vmatprep.subr.mxu0 0.0
        %1252 = vmatpush1.msra.mxu0 0.0
        %1253 = vmatprep.subr.mxu0 0.0
        %1254 = vmatpush1.msra.mxu0 0.0
        %1255 = vmatprep.subr.mxu0 0.0
        %1256 = vmatpush1.msra.mxu0 0.0
        %1257 = vmatprep.subr.mxu0 0.0
        %1258 = vmatpush1.msra.mxu0 0.0
        %1259 = vmatprep.subr.mxu0 0.0
        %1260 = vmatpush1.msra.mxu0 0.0
        %1261 = vmatprep.subr.mxu0 0.0
        %1262 = vmatpush1.msra.mxu0 0.0
        %1263 = vmatprep.subr.mxu0 0.0
        %1264 = vmatpush1.msra.mxu0 0.0
        %1265 = vmatprep.subr.mxu0 0.0
        %1266 = vmatpush1.msra.mxu0 0.0
        %1267 = vmatprep.subr.mxu0 0.0
        %1268 = vmatpush1.msra.mxu0 0.0
        %1269 = vmatprep.subr.mxu0 0.0
        %1270 = vmatpush1.msra.mxu0 0.0
        %1271 = vmatprep.subr.mxu0 0.0
        %1272 = vmatpush1.msra.mxu0 0.0
        %1273 = vmatprep.subr.mxu0 0.0
        %1274 = vmatpush1.msra.mxu0 0.0
        %1275 = vmatprep.subr.mxu0 0.0
        %1276 = vmatpush1.msra.mxu0 0.0
        %1277 = vmatprep.subr.mxu0 0.0
        %1278 = vmatpush1.msra.mxu0 0.0
        %1279 = vmatprep.subr.mxu0 0.0
        %1280 = vmatpush1.msra.mxu0 0.0
        %1281 = vmatprep.subr.mxu0 0.0
        %1282 = vmatpush1.msra.mxu0 0.0
        %1283 = vmatprep.subr.mxu0 0.0
        %1284 = vmatpush1.msra.mxu0 0.0
        %1285 = vmatprep.mubr.f32.mxu0 0.0
        %1286 = vmatmul.mubr.f32.gmra.mrb[0].mxu0 %v1219
        %v1287 = vpop.f32.mrb[0].mxu0
        %v1288 = vadd.f32 0.0, %v1287
        %v1289 = vpop.f32.mrb[0].mxu0
        %1290 = vdwg.mxu0
        %v1292 = vsel %vm1144, %v1138, 0
        %1294 = vmatprep.subr.mxu0 0.0
        %1295 = vmatpush1.msra.mxu0 %v442
        %1296 = vmatprep.subr.mxu0 0.0
        %1297 = vmatpush1.msra.mxu0 %v443
        %1298 = vmatprep.subr.mxu0 0.0
        %1299 = vmatpush1.msra.mxu0 0.0
        %1300 = vmatprep.subr.mxu0 0.0
        %1301 = vmatpush1.msra.mxu0 0.0
        %1302 = vmatprep.subr.mxu0 0.0
        %1303 = vmatpush1.msra.mxu0 0.0
        %1304 = vmatprep.subr.mxu0 0.0
        %1305 = vmatpush1.msra.mxu0 0.0
        %1306 = vmatprep.subr.mxu0 0.0
        %1307 = vmatpush1.msra.mxu0 0.0
        %1308 = vmatprep.subr.mxu0 0.0
        %1309 = vmatpush1.msra.mxu0 0.0
        %1310 = vmatprep.subr.mxu0 0.0
        %1311 = vmatpush1.msra.mxu0 0.0
        %1312 = vmatprep.subr.mxu0 0.0
        %1313 = vmatpush1.msra.mxu0 0.0
        %1314 = vmatprep.subr.mxu0 0.0
        %1315 = vmatpush1.msra.mxu0 0.0
        %1316 = vmatprep.subr.mxu0 0.0
        %1317 = vmatpush1.msra.mxu0 0.0
        %1318 = vmatprep.subr.mxu0 0.0
        %1319 = vmatpush1.msra.mxu0 0.0
        %1320 = vmatprep.subr.mxu0 0.0
        %1321 = vmatpush1.msra.mxu0 0.0
        %1322 = vmatprep.subr.mxu0 0.0
        %1323 = vmatpush1.msra.mxu0 0.0
        %1324 = vmatprep.subr.mxu0 0.0
        %1325 = vmatpush1.msra.mxu0 0.0
        %1326 = vmatprep.subr.mxu0 0.0
        %1327 = vmatpush1.msra.mxu0 0.0
        %1328 = vmatprep.subr.mxu0 0.0
        %1329 = vmatpush1.msra.mxu0 0.0
        %1330 = vmatprep.subr.mxu0 0.0
        %1331 = vmatpush1.msra.mxu0 0.0
        %1332 = vmatprep.subr.mxu0 0.0
        %1333 = vmatpush1.msra.mxu0 0.0
        %1334 = vmatprep.subr.mxu0 0.0
        %1335 = vmatpush1.msra.mxu0 0.0
        %1336 = vmatprep.subr.mxu0 0.0
        %1337 = vmatpush1.msra.mxu0 0.0
        %1338 = vmatprep.subr.mxu0 0.0
        %1339 = vmatpush1.msra.mxu0 0.0
        %1340 = vmatprep.subr.mxu0 0.0
        %1341 = vmatpush1.msra.mxu0 0.0
        %1342 = vmatprep.subr.mxu0 0.0
        %1343 = vmatpush1.msra.mxu0 0.0
        %1344 = vmatprep.subr.mxu0 0.0
        %1345 = vmatpush1.msra.mxu0 0.0
        %1346 = vmatprep.subr.mxu0 0.0
        %1347 = vmatpush1.msra.mxu0 0.0
        %1348 = vmatprep.subr.mxu0 0.0
        %1349 = vmatpush1.msra.mxu0 0.0
        %1350 = vmatprep.subr.mxu0 0.0
        %1351 = vmatpush1.msra.mxu0 0.0
        %1352 = vmatprep.subr.mxu0 0.0
        %1353 = vmatpush1.msra.mxu0 0.0
        %1354 = vmatprep.subr.mxu0 0.0
        %1355 = vmatpush1.msra.mxu0 0.0
        %1356 = vmatprep.subr.mxu0 0.0
        %1357 = vmatpush1.msra.mxu0 0.0
        %1358 = vmatprep.mubr.f32.mxu0 0.0
        %1359 = vmatmul.mubr.f32.gmra.mrb[0].mxu0 %v1292
        %v1360 = vpop.f32.mrb[0].mxu0
        %v1361 = vadd.f32 0.0, %v1360
        %v1362 = vpop.f32.mrb[0].mxu0
        %1363 = vdwg.mxu0
        %v1365 = vsel %vm1144, %v1139, 0
        %1367 = vmatprep.subr.mxu0 0.0
        %1368 = vmatpush1.msra.mxu0 %v444
        %1369 = vmatprep.subr.mxu0 0.0
        %1370 = vmatpush1.msra.mxu0 %v445
        %1371 = vmatprep.subr.mxu0 0.0
        %1372 = vmatpush1.msra.mxu0 0.0
        %1373 = vmatprep.subr.mxu0 0.0
        %1374 = vmatpush1.msra.mxu0 0.0
        %1375 = vmatprep.subr.mxu0 0.0
        %1376 = vmatpush1.msra.mxu0 0.0
        %1377 = vmatprep.subr.mxu0 0.0
        %1378 = vmatpush1.msra.mxu0 0.0
        %1379 = vmatprep.subr.mxu0 0.0
        %1380 = vmatpush1.msra.mxu0 0.0
        %1381 = vmatprep.subr.mxu0 0.0
        %1382 = vmatpush1.msra.mxu0 0.0
        %1383 = vmatprep.subr.mxu0 0.0
        %1384 = vmatpush1.msra.mxu0 0.0
        %1385 = vmatprep.subr.mxu0 0.0
        %1386 = vmatpush1.msra.mxu0 0.0
        %1387 = vmatprep.subr.mxu0 0.0
        %1388 = vmatpush1.msra.mxu0 0.0
        %1389 = vmatprep.subr.mxu0 0.0
        %1390 = vmatpush1.msra.mxu0 0.0
        %1391 = vmatprep.subr.mxu0 0.0
        %1392 = vmatpush1.msra.mxu0 0.0
        %1393 = vmatprep.subr.mxu0 0.0
        %1394 = vmatpush1.msra.mxu0 0.0
        %1395 = vmatprep.subr.mxu0 0.0
        %1396 = vmatpush1.msra.mxu0 0.0
        %1397 = vmatprep.subr.mxu0 0.0
        %1398 = vmatpush1.msra.mxu0 0.0
        %1399 = vmatprep.subr.mxu0 0.0
        %1400 = vmatpush1.msra.mxu0 0.0
        %1401 = vmatprep.subr.mxu0 0.0
        %1402 = vmatpush1.msra.mxu0 0.0
        %1403 = vmatprep.subr.mxu0 0.0
        %1404 = vmatpush1.msra.mxu0 0.0
        %1405 = vmatprep.subr.mxu0 0.0
        %1406 = vmatpush1.msra.mxu0 0.0
        %1407 = vmatprep.subr.mxu0 0.0
        %1408 = vmatpush1.msra.mxu0 0.0
        %1409 = vmatprep.subr.mxu0 0.0
        %1410 = vmatpush1.msra.mxu0 0.0
        %1411 = vmatprep.subr.mxu0 0.0
        %1412 = vmatpush1.msra.mxu0 0.0
        %1413 = vmatprep.subr.mxu0 0.0
        %1414 = vmatpush1.msra.mxu0 0.0
        %1415 = vmatprep.subr.mxu0 0.0
        %1416 = vmatpush1.msra.mxu0 0.0
        %1417 = vmatprep.subr.mxu0 0.0
        %1418 = vmatpush1.msra.mxu0 0.0
        %1419 = vmatprep.subr.mxu0 0.0
        %1420 = vmatpush1.msra.mxu0 0.0
        %1421 = vmatprep.subr.mxu0 0.0
        %1422 = vmatpush1.msra.mxu0 0.0
        %1423 = vmatprep.subr.mxu0 0.0
        %1424 = vmatpush1.msra.mxu0 0.0
        %1425 = vmatprep.subr.mxu0 0.0
        %1426 = vmatpush1.msra.mxu0 0.0
        %1427 = vmatprep.subr.mxu0 0.0
        %1428 = vmatpush1.msra.mxu0 0.0
        %1429 = vmatprep.subr.mxu0 0.0
        %1430 = vmatpush1.msra.mxu0 0.0
        %1431 = vmatprep.mubr.f32.mxu0 0.0
        %1432 = vmatmul.mubr.f32.gmra.mrb[0].mxu0 %v1365
        %v1433 = vpop.f32.mrb[0].mxu0
        %v1434 = vadd.f32 0.0, %v1433
        %v1435 = vpop.f32.mrb[0].mxu0
        %1436 = vdwg.mxu0
        %vm1437 = vcmask 516096
        %1438 = vst.msk [vmem:[%s408] sm:$0x1] %vm1437, %v1215
        %1439 = vst.msk [vmem:[%s408 + $0x1] sm:$0x1] %vm1437, %v1288
        %1440 = vst.msk [vmem:[%s408 + $0x2] sm:$0x1] %vm1437, %v1361
        %1441 = vst.msk [vmem:[%s408 + $0x3] sm:$0x1] %vm1437, %v1434
        %s1442 = sand.u32 %s186, 1
        %s1443 = scalar_lea.sflag [#allocation4], %s1442
        %s1444 = sand.u32 %s186, 1
        %s1445 = smul.addr %s1444, 4
        %s1446 = scalar_lea.vmem [#allocation10], %s1445
        %s1447 = sand.u32 %s212, 1
        %s1448 = scalar_lea.sflag [#allocation12], %s1447
        %s1449 = sand.u32 %s212, 1
        %s1450 = smul.addr %s1449, 4
        %s1451 = scalar_lea.vmem [#allocation11], %s1450
        // Predicated region
        $region61: #{tpu_custom_call.1} parent=43 // pred_check
          %p1452 = pneg %p196
        $region62: #{tpu_custom_call.1} parent=43 // pred_check_branch
          %1454 = sbr.rel (%p1452) target = $region64
        $region63: #{tpu_custom_call.1} parent=43 // pred_region
          %s1455 = smul.u32 4, %s32
          %s1457 = ssub.s32 64, 64
          %1458 = vsyncadd %s1443, %s1457
          %s1459 = smul.addr %s1455, 16
          %s1460 = scalar_lea.hbm %s6, %s1459
          %s1461 = sshll.u32 %s1446, 4
          %s1462 = int_to_ptr.vmem [resolvable:$true] %s1461
          %1467 = dma.vmem_to_hbm [thread:$0]  %s1462, 64, %s1460, %s1443, 16, 16, 1
        $region64: #{tpu_custom_call.1} parent=43 // pred_fallthru
          _
        // Predicated region
        $region65: #{tpu_custom_call.1} parent=43 // pred_check
          %p1468 = pneg %p222
        $region66: #{tpu_custom_call.1} parent=43 // pred_check_branch
          %1470 = sbr.rel (%p1468) target = $region68
        $region67: #{tpu_custom_call.1} parent=43 // pred_region
          %s1471 = smul.u32 4, %s32
          %s1473 = ssub.s32 64, 64
          %1474 = vsyncadd %s1448, %s1473
          %s1475 = smul.addr %s1471, 16
          %s1476 = scalar_lea.hbm %s7, %s1475
          %s1477 = sshll.u32 %s1451, 4
          %s1478 = int_to_ptr.vmem [resolvable:$true] %s1477
          %1483 = dma.vmem_to_hbm [thread:$0]  %s1478, 64, %s1476, %s1448, 16, 16, 1
        $region68: #{tpu_custom_call.1} parent=43 // pred_fallthru
          _
      $region44: #{tpu_custom_call.1} parent=5 // pred_fallthru
        _
      %p1484 = scmp.le.s32.totalorder 2, %s27
      // Predicated region
      $region69: #{tpu_custom_call.1} parent=5 // pred_check
        %p1485 = pneg %p1484
      $region70: #{tpu_custom_call.1} parent=5 // pred_check_branch
        %1487 = sbr.rel (%p1485) target = $region72
      $region71: #{tpu_custom_call.1} parent=5 // pred_region
        %s1488 = ssub.s32 %s27, 2
        // Predicated region
        $region73: #{tpu_custom_call.1} parent=71 // pred_check
          %p1489 = pneg %p202
        $region74: #{tpu_custom_call.1} parent=71 // pred_check_branch
          %1491 = sbr.rel (%p1489) target = $region76
        $region75: #{tpu_custom_call.1} parent=71 // pred_region
          %s1492 = sand.u32 %s187, 1
          %s1493 = scalar_lea.sflag [#allocation4], %s1492
          %s1494 = sand.u32 %s187, 1
          %s1495 = smul.addr %s1494, 4
          %s1496 = scalar_lea.vmem [#allocation10], %s1495
          %1497 = dma.done %s1493, 64
        $region76: #{tpu_custom_call.1} parent=71 // pred_fallthru
          _
        // Predicated region
        $region77: #{tpu_custom_call.1} parent=71 // pred_check
          %p1498 = pneg %p228
        $region78: #{tpu_custom_call.1} parent=71 // pred_check_branch
          %1500 = sbr.rel (%p1498) target = $region80
        $region79: #{tpu_custom_call.1} parent=71 // pred_region
          %s1501 = sand.u32 %s213, 1
          %s1502 = scalar_lea.sflag [#allocation12], %s1501
          %s1503 = sand.u32 %s213, 1
          %s1504 = smul.addr %s1503, 4
          %s1505 = scalar_lea.vmem [#allocation11], %s1504
          %1506 = dma.done %s1502, 64
        $region80: #{tpu_custom_call.1} parent=71 // pred_fallthru
          _
      $region72: #{tpu_custom_call.1} parent=5 // pred_fallthru
        _
    $region6: #{tpu_custom_call.1} parent=1 // loop_footer
      %s31 = sadd.s32 1, %s27
    $region7: #{tpu_custom_call.1} parent=1 // loop_footer_branch
      %26 = sbr.rel target = $region3
    $region8: #{tpu_custom_call.1} parent=1 // loop_exit
      _
    %1507 = vsyncpa [#allocation3], 1
    %s1508 = scalar_lea.sflag [#allocation3], 1
    %1509 = vsyncpa %s1508, 1
    %1510 = vsyncpa [#allocation6], 1
    %s1511 = scalar_lea.sflag [#allocation6], 1
    %1512 = vsyncpa %s1511, 1
    %1513 = vsyncpa [#allocation9], 1
    %1514 = vsyncpa [#allocation4], 1
    %s1515 = scalar_lea.sflag [#allocation4], 1
    %1516 = vsyncpa %s1515, 1
    %1517 = vsyncpa [#allocation12], 1
    %s1518 = scalar_lea.sflag [#allocation12], 1
    %1519 = vsyncpa %s1518, 1

</llo_original>
